<compile_context>
chip_gen: v7x
topology: tpu7x:2x2x1
jax: 0.10.0
libtpu: 0.0.40
codegen_flags: <defaults>
</compile_context>

<pallas_src>
import math
import jax
import jax.numpy as jnp
from jax.experimental import pallas as pl
from jax.experimental.pallas import tpu as pltpu


def _make_lstm_kernel(n_layers, seq_len, b_pad):
    """Kernel closed over static layer count / sequence length / padded batch.

    Refs (in order): x_slab, [W_ih, W_hh, b] * n_layers, fc_w, fc_b, out,
    slab_scratch (VMEM, inter-layer hidden-sequence buffer).
    Gate order matches PyTorch: [i, f, g, o]; bias is (b_ih + b_hh).
    """

    def kernel(*refs):
        x_ref = refs[0]
        p = 1
        layer_refs = []
        for _ in range(n_layers):
            layer_refs.append((refs[p], refs[p + 1], refs[p + 2]))
            p += 3
        fcw_ref, fcb_ref = refs[p], refs[p + 1]
        out_ref = refs[p + 2]
        slab_ref = refs[p + 3]                      # VMEM scratch (T*B_pad, H)

        h = None
        for l, (wih_ref, whh_ref, b_ref) in enumerate(layer_refs):
            wih = wih_ref[...]                      # (I_l, 4H) bf16
            whh = whh_ref[...]                      # (H,   4H) bf16
            bias = b_ref[...]                       # (1,   4H) f32
            H = whh.shape[0]
            last = (l == n_layers - 1)

            # Layer input as one contiguous slab (rows t*B_pad .. t*B_pad+B_pad-1
            # hold timestep t for all batch rows).
            if l == 0:
                slab_in = x_ref[...].astype(jnp.bfloat16)       # (T*Bp, I)
            else:
                slab_in = slab_ref[...].astype(jnp.bfloat16)    # (T*Bp, H)

            # Hoisted input projection + bias: one MXU-friendly matmul per layer.
            proj = (
                jnp.dot(slab_in, wih, preferred_element_type=jnp.float32) + bias
            )                                                   # (T*Bp, 4H) f32

            h = jnp.zeros((b_pad, H), jnp.float32)
            c = jnp.zeros((b_pad, H), jnp.float32)
            for t in range(seq_len):
                # Only the recurrent matmul stays on the serial path.
                gates = proj[t * b_pad:(t + 1) * b_pad, :] + jnp.dot(
                    h.astype(jnp.bfloat16), whh,
                    preferred_element_type=jnp.float32)          # (Bp, 4H)

                # Full-width nonlinearities (2 EUP passes instead of 4).
                sig = jax.nn.sigmoid(gates)
                th = jnp.tanh(gates)
                i_g = sig[:, 0 * H:1 * H]
                f_g = sig[:, 1 * H:2 * H]
                o_g = sig[:, 3 * H:4 * H]
                g_g = th[:, 2 * H:3 * H]

                c = f_g * c + i_g * g_g
                h = o_g * jnp.tanh(c)

                if not last:
                    # Feed the next layer via the VMEM slab (sublane-aligned rows).
                    slab_ref[t * b_pad:(t + 1) * b_pad, :] = h

        out_ref[...] = (
            jnp.dot(h.astype(jnp.bfloat16), fcw_ref[...],
                    preferred_element_type=jnp.float32)
            + fcb_ref[...]
        )

    return kernel


def lstm_forward(x, params):
    """x: (B, T, n_series) float32. params: dict with 'layers' and fc weights."""
    B, T, I = x.shape
    n_layers = len(params["layers"])
    H = params["layers"][0][1].shape[0]
    n_series = params["fc_w"].shape[1]

    # Pad batch to the 8-row sublane tile; extra rows are ignored at the end.
    b_pad = max(8, ((B + 7) // 8) * 8)
    x_t = jnp.transpose(x, (1, 0, 2)).astype(jnp.float32)        # (T, B, I)
    x_t = jnp.pad(x_t, ((0, 0), (0, b_pad - B), (0, 0)))          # (T, Bp, I)
    x_slab = x_t.reshape(T * b_pad, I)                            # (T*Bp, I)

    inputs = [x_slab]
    for (wih, whh, b) in params["layers"]:
        inputs += [wih.astype(jnp.bfloat16), whh.astype(jnp.bfloat16), b]
    inputs += [params["fc_w"].astype(jnp.bfloat16), params["fc_b"]]

    # Advisory cost estimate for XLA's scheduler.
    flops = 2 * b_pad * H * n_series
    transcendentals = 0
    for (wih, whh, _) in params["layers"]:
        flops += 2 * T * b_pad * wih.shape[0] * wih.shape[1]      # input proj
        flops += 2 * T * b_pad * whh.shape[0] * whh.shape[1]      # recurrence
        transcendentals += T * b_pad * 9 * H                      # 2*4H + H per step
    bytes_accessed = sum(int(a.size) * a.dtype.itemsize for a in inputs)
    bytes_accessed += b_pad * n_series * 4

    vmem_spec = pl.BlockSpec(memory_space=pltpu.MemorySpace.VMEM)

    out_pad = pl.pallas_call(
        _make_lstm_kernel(n_layers, T, b_pad),
        out_shape=jax.ShapeDtypeStruct((b_pad, n_series), jnp.float32),
        in_specs=[vmem_spec] * len(inputs),
        out_specs=vmem_spec,
        scratch_shapes=[pltpu.VMEM((T * b_pad, H), jnp.float32)],
        cost_estimate=pl.CostEstimate(
            flops=int(flops),
            transcendentals=int(transcendentals),
            bytes_accessed=int(bytes_accessed),
        ),
    )(*inputs)
    return out_pad[:B]


def init_params(key, n_series, hidden, n_layers):
    """Deterministic init mimicking PyTorch uniform(-1/sqrt(H), 1/sqrt(H))."""
    bound = 1.0 / math.sqrt(hidden)
    layers = []
    for l in range(n_layers):
        in_dim = n_series if l == 0 else hidden
        key, k1, k2, k3, k4 = jax.random.split(key, 5)
        # stored transposed relative to PyTorch: (in, 4H) and (H, 4H)
        wih = jax.random.uniform(k1, (in_dim, 4 * hidden), jnp.float32, -bound, bound)
        whh = jax.random.uniform(k2, (hidden, 4 * hidden), jnp.float32, -bound, bound)
        b_ih = jax.random.uniform(k3, (4 * hidden,), jnp.float32, -bound, bound)
        b_hh = jax.random.uniform(k4, (4 * hidden,), jnp.float32, -bound, bound)
        layers.append((wih, whh, (b_ih + b_hh)[None, :]))
    key, k5, k6 = jax.random.split(key, 3)
    fc_bound = 1.0 / math.sqrt(hidden)
    fc_w = jax.random.uniform(k5, (hidden, n_series), jnp.float32, -fc_bound, fc_bound)
    fc_b = jax.random.uniform(k6, (1, n_series), jnp.float32, -fc_bound, fc_bound)
    return {"layers": layers, "fc_w": fc_w, "fc_b": fc_b}


def reference_forward(x, params):
    """Pure-JAX reference of the same math (PyTorch LSTM semantics), mirroring
    the kernel's bf16-weight / bf16-LHS / f32-accumulate matmul precision."""
    B, T, _ = x.shape
    seq = x.astype(jnp.float32)
    for (wih, whh, b) in params["layers"]:
        H = whh.shape[0]
        wih_b = wih.astype(jnp.bfloat16)
        whh_b = whh.astype(jnp.bfloat16)
        proj = jnp.dot(
            seq.astype(jnp.bfloat16).reshape(B * T, -1), wih_b,
            preferred_element_type=jnp.float32,
        ).reshape(B, T, 4 * H) + b
        h = jnp.zeros((B, H), jnp.float32)
        c = jnp.zeros((B, H), jnp.float32)
        outs = []
        for t in range(T):
            gates = proj[:, t, :] + jnp.dot(
                h.astype(jnp.bfloat16), whh_b, preferred_element_type=jnp.float32)
            i_g = jax.nn.sigmoid(gates[:, 0 * H:1 * H])
            f_g = jax.nn.sigmoid(gates[:, 1 * H:2 * H])
            g_g = jnp.tanh(gates[:, 2 * H:3 * H])
            o_g = jax.nn.sigmoid(gates[:, 3 * H:4 * H])
            c = f_g * c + i_g * g_g
            h = o_g * jnp.tanh(c)
            outs.append(h)
        seq = jnp.stack(outs, axis=1)
    return jnp.dot(
        seq[:, -1].astype(jnp.bfloat16), params["fc_w"].astype(jnp.bfloat16),
        preferred_element_type=jnp.float32,
    ) + params["fc_b"]


if __name__ == "__main__":
    # args.n_series=4, args.lstm_hidden_size=32, args.lstm_n_layers=2
    batch, seq_len, n_series, hidden, n_layers = 2, 8, 4, 32, 2

    key = jax.random.PRNGKey(0)
    kx, kp = jax.random.split(key)
    x = jax.random.normal(kx, (batch, seq_len, n_series), jnp.float32)
    params = init_params(kp, n_series, hidden, n_layers)

    out = lstm_forward(x, params)
    out = jax.block_until_ready(out)

    ref = reference_forward(x, params)
    assert out.shape == (batch, n_series)
    assert jnp.allclose(out, ref, atol=2e-3, rtol=2e-3), (out, ref)

    print("KERNEL_OK")
</pallas_src>

<mosaic_0001>
module attributes {stable_mosaic.version = 11 : i64} {
  func.func @kernel(%arg0: memref<64x4xf32, #tpu.memory_space<vmem>>, %arg1: memref<4x128xbf16, #tpu.memory_space<vmem>>, %arg2: memref<32x128xbf16, #tpu.memory_space<vmem>>, %arg3: memref<1x128xf32, #tpu.memory_space<vmem>>, %arg4: memref<32x128xbf16, #tpu.memory_space<vmem>>, %arg5: memref<32x128xbf16, #tpu.memory_space<vmem>>, %arg6: memref<1x128xf32, #tpu.memory_space<vmem>>, %arg7: memref<32x4xbf16, #tpu.memory_space<vmem>>, %arg8: memref<1x4xf32, #tpu.memory_space<vmem>>, %arg9: memref<8x4xf32, #tpu.memory_space<vmem>>, %arg10: memref<64x32xf32, #tpu.memory_space<vmem>>) attributes {dimension_semantics = [], scalar_prefetch = 0 : i64, scratch_operands = 1 : i64, tpu.core_type = #tpu.core_type<tc>} {
    %c0 = arith.constant 0 : index
    %c0_0 = arith.constant 0 : index
    %0 = vector.load %arg1[%c0, %c0_0] : memref<4x128xbf16, #tpu.memory_space<vmem>>, vector<4x128xbf16>
    %c0_1 = arith.constant 0 : index
    %c0_2 = arith.constant 0 : index
    %1 = vector.load %arg2[%c0_1, %c0_2] : memref<32x128xbf16, #tpu.memory_space<vmem>>, vector<32x128xbf16>
    %c0_3 = arith.constant 0 : index
    %c0_4 = arith.constant 0 : index
    %2 = vector.load %arg3[%c0_3, %c0_4] : memref<1x128xf32, #tpu.memory_space<vmem>>, vector<1x128xf32>
    %c0_5 = arith.constant 0 : index
    %c0_6 = arith.constant 0 : index
    %3 = vector.load %arg0[%c0_5, %c0_6] : memref<64x4xf32, #tpu.memory_space<vmem>>, vector<64x4xf32>
    %4 = arith.truncf %3 : vector<64x4xf32> to vector<64x4xbf16>
    %cst = arith.constant dense<0.000000e+00> : vector<64x128xf32>
    %5 = tpu.matmul %4, %0, %cst {dimension_numbers = #tpu.dot_dimension_numbers<[1], [0], [0], [1], [0, 0, 1, 1], [], []>} : vector<64x4xbf16>, vector<4x128xbf16>, vector<64x128xf32> -> vector<64x128xf32>
    %6 = vector.broadcast %2 : vector<1x128xf32> to vector<64x128xf32>
    %7 = arith.addf %5, %6 : vector<64x128xf32>
    %cst_7 = arith.constant 0.000000e+00 : f32
    %8 = vector.broadcast %cst_7 : f32 to vector<8x32xf32>
    %cst_8 = arith.constant 0.000000e+00 : f32
    %9 = vector.broadcast %cst_8 : f32 to vector<8x32xf32>
    %10 = vector.extract_strided_slice %7 {offsets = [0, 0], sizes = [8, 128], strides = [1, 1]} : vector<64x128xf32> to vector<8x128xf32>
    %11 = arith.truncf %8 : vector<8x32xf32> to vector<8x32xbf16>
    %cst_9 = arith.constant dense<0.000000e+00> : vector<8x128xf32>
    %12 = tpu.matmul %11, %1, %cst_9 {dimension_numbers = #tpu.dot_dimension_numbers<[1], [0], [0], [1], [0, 0, 1, 1], [], []>} : vector<8x32xbf16>, vector<32x128xbf16>, vector<8x128xf32> -> vector<8x128xf32>
    %13 = arith.addf %10, %12 : vector<8x128xf32>
    %14 = arith.negf %13 : vector<8x128xf32>
    %15 = math.exp %14 : vector<8x128xf32>
    %cst_10 = arith.constant 1.000000e+00 : f32
    %16 = vector.broadcast %cst_10 : f32 to vector<8x128xf32>
    %17 = arith.addf %16, %15 : vector<8x128xf32>
    %18 = arith.divf %16, %17 : vector<8x128xf32>
    %19 = math.tanh %13 : vector<8x128xf32>
    %20 = vector.extract_strided_slice %18 {offsets = [0, 0], sizes = [8, 32], strides = [1, 1]} : vector<8x128xf32> to vector<8x32xf32>
    %21 = vector.extract_strided_slice %18 {offsets = [0, 32], sizes = [8, 32], strides = [1, 1]} : vector<8x128xf32> to vector<8x32xf32>
    %22 = vector.extract_strided_slice %18 {offsets = [0, 96], sizes = [8, 32], strides = [1, 1]} : vector<8x128xf32> to vector<8x32xf32>
    %23 = vector.extract_strided_slice %19 {offsets = [0, 64], sizes = [8, 32], strides = [1, 1]} : vector<8x128xf32> to vector<8x32xf32>
    %24 = arith.mulf %21, %9 : vector<8x32xf32>
    %25 = arith.mulf %20, %23 : vector<8x32xf32>
    %26 = arith.addf %24, %25 : vector<8x32xf32>
    %27 = math.tanh %26 : vector<8x32xf32>
    %28 = arith.mulf %22, %27 : vector<8x32xf32>
    %c0_11 = arith.constant 0 : index
    %c0_12 = arith.constant 0 : index
    %29 = vector.load %arg10[%c0_11, %c0_12] : memref<64x32xf32, #tpu.memory_space<vmem>>, vector<8x32xf32>
    tpu.vector_store %arg10[%c0_11, %c0_12], %28 {strides = array<i32>} : memref<64x32xf32, #tpu.memory_space<vmem>>, vector<8x32xf32>,
    %30 = vector.extract_strided_slice %7 {offsets = [8, 0], sizes = [8, 128], strides = [1, 1]} : vector<64x128xf32> to vector<8x128xf32>
    %31 = arith.truncf %28 : vector<8x32xf32> to vector<8x32xbf16>
    %cst_13 = arith.constant dense<0.000000e+00> : vector<8x128xf32>
    %32 = tpu.matmul %31, %1, %cst_13 {dimension_numbers = #tpu.dot_dimension_numbers<[1], [0], [0], [1], [0, 0, 1, 1], [], []>} : vector<8x32xbf16>, vector<32x128xbf16>, vector<8x128xf32> -> vector<8x128xf32>
    %33 = arith.addf %30, %32 : vector<8x128xf32>
    %34 = arith.negf %33 : vector<8x128xf32>
    %35 = math.exp %34 : vector<8x128xf32>
    %cst_14 = arith.constant 1.000000e+00 : f32
    %36 = vector.broadcast %cst_14 : f32 to vector<8x128xf32>
    %37 = arith.addf %36, %35 : vector<8x128xf32>
    %38 = arith.divf %36, %37 : vector<8x128xf32>
    %39 = math.tanh %33 : vector<8x128xf32>
    %40 = vector.extract_strided_slice %38 {offsets = [0, 0], sizes = [8, 32], strides = [1, 1]} : vector<8x128xf32> to vector<8x32xf32>
    %41 = vector.extract_strided_slice %38 {offsets = [0, 32], sizes = [8, 32], strides = [1, 1]} : vector<8x128xf32> to vector<8x32xf32>
    %42 = vector.extract_strided_slice %38 {offsets = [0, 96], sizes = [8, 32], strides = [1, 1]} : vector<8x128xf32> to vector<8x32xf32>
    %43 = vector.extract_strided_slice %39 {offsets = [0, 64], sizes = [8, 32], strides = [1, 1]} : vector<8x128xf32> to vector<8x32xf32>
    %44 = arith.mulf %41, %26 : vector<8x32xf32>
    %45 = arith.mulf %40, %43 : vector<8x32xf32>
    %46 = arith.addf %44, %45 : vector<8x32xf32>
    %47 = math.tanh %46 : vector<8x32xf32>
    %48 = arith.mulf %42, %47 : vector<8x32xf32>
    %c8 = arith.constant 8 : index
    %c0_15 = arith.constant 0 : index
    %49 = vector.load %arg10[%c8, %c0_15] : memref<64x32xf32, #tpu.memory_space<vmem>>, vector<8x32xf32>
    tpu.vector_store %arg10[%c8, %c0_15], %48 {strides = array<i32>} : memref<64x32xf32, #tpu.memory_space<vmem>>, vector<8x32xf32>,
    %50 = vector.extract_strided_slice %7 {offsets = [16, 0], sizes = [8, 128], strides = [1, 1]} : vector<64x128xf32> to vector<8x128xf32>
    %51 = arith.truncf %48 : vector<8x32xf32> to vector<8x32xbf16>
    %cst_16 = arith.constant dense<0.000000e+00> : vector<8x128xf32>
    %52 = tpu.matmul %51, %1, %cst_16 {dimension_numbers = #tpu.dot_dimension_numbers<[1], [0], [0], [1], [0, 0, 1, 1], [], []>} : vector<8x32xbf16>, vector<32x128xbf16>, vector<8x128xf32> -> vector<8x128xf32>
    %53 = arith.addf %50, %52 : vector<8x128xf32>
    %54 = arith.negf %53 : vector<8x128xf32>
    %55 = math.exp %54 : vector<8x128xf32>
    %cst_17 = arith.constant 1.000000e+00 : f32
    %56 = vector.broadcast %cst_17 : f32 to vector<8x128xf32>
    %57 = arith.addf %56, %55 : vector<8x128xf32>
    %58 = arith.divf %56, %57 : vector<8x128xf32>
    %59 = math.tanh %53 : vector<8x128xf32>
    %60 = vector.extract_strided_slice %58 {offsets = [0, 0], sizes = [8, 32], strides = [1, 1]} : vector<8x128xf32> to vector<8x32xf32>
    %61 = vector.extract_strided_slice %58 {offsets = [0, 32], sizes = [8, 32], strides = [1, 1]} : vector<8x128xf32> to vector<8x32xf32>
    %62 = vector.extract_strided_slice %58 {offsets = [0, 96], sizes = [8, 32], strides = [1, 1]} : vector<8x128xf32> to vector<8x32xf32>
    %63 = vector.extract_strided_slice %59 {offsets = [0, 64], sizes = [8, 32], strides = [1, 1]} : vector<8x128xf32> to vector<8x32xf32>
    %64 = arith.mulf %61, %46 : vector<8x32xf32>
    %65 = arith.mulf %60, %63 : vector<8x32xf32>
    %66 = arith.addf %64, %65 : vector<8x32xf32>
    %67 = math.tanh %66 : vector<8x32xf32>
    %68 = arith.mulf %62, %67 : vector<8x32xf32>
    %c16 = arith.constant 16 : index
    %c0_18 = arith.constant 0 : index
    %69 = vector.load %arg10[%c16, %c0_18] : memref<64x32xf32, #tpu.memory_space<vmem>>, vector<8x32xf32>
    tpu.vector_store %arg10[%c16, %c0_18], %68 {strides = array<i32>} : memref<64x32xf32, #tpu.memory_space<vmem>>, vector<8x32xf32>,
    %70 = vector.extract_strided_slice %7 {offsets = [24, 0], sizes = [8, 128], strides = [1, 1]} : vector<64x128xf32> to vector<8x128xf32>
    %71 = arith.truncf %68 : vector<8x32xf32> to vector<8x32xbf16>
    %cst_19 = arith.constant dense<0.000000e+00> : vector<8x128xf32>
    %72 = tpu.matmul %71, %1, %cst_19 {dimension_numbers = #tpu.dot_dimension_numbers<[1], [0], [0], [1], [0, 0, 1, 1], [], []>} : vector<8x32xbf16>, vector<32x128xbf16>, vector<8x128xf32> -> vector<8x128xf32>
    %73 = arith.addf %70, %72 : vector<8x128xf32>
    %74 = arith.negf %73 : vector<8x128xf32>
    %75 = math.exp %74 : vector<8x128xf32>
    %cst_20 = arith.constant 1.000000e+00 : f32
    %76 = vector.broadcast %cst_20 : f32 to vector<8x128xf32>
    %77 = arith.addf %76, %75 : vector<8x128xf32>
    %78 = arith.divf %76, %77 : vector<8x128xf32>
    %79 = math.tanh %73 : vector<8x128xf32>
    %80 = vector.extract_strided_slice %78 {offsets = [0, 0], sizes = [8, 32], strides = [1, 1]} : vector<8x128xf32> to vector<8x32xf32>
    %81 = vector.extract_strided_slice %78 {offsets = [0, 32], sizes = [8, 32], strides = [1, 1]} : vector<8x128xf32> to vector<8x32xf32>
    %82 = vector.extract_strided_slice %78 {offsets = [0, 96], sizes = [8, 32], strides = [1, 1]} : vector<8x128xf32> to vector<8x32xf32>
    %83 = vector.extract_strided_slice %79 {offsets = [0, 64], sizes = [8, 32], strides = [1, 1]} : vector<8x128xf32> to vector<8x32xf32>
    %84 = arith.mulf %81, %66 : vector<8x32xf32>
    %85 = arith.mulf %80, %83 : vector<8x32xf32>
    %86 = arith.addf %84, %85 : vector<8x32xf32>
    %87 = math.tanh %86 : vector<8x32xf32>
    %88 = arith.mulf %82, %87 : vector<8x32xf32>
    %c24 = arith.constant 24 : index
    %c0_21 = arith.constant 0 : index
    %89 = vector.load %arg10[%c24, %c0_21] : memref<64x32xf32, #tpu.memory_space<vmem>>, vector<8x32xf32>
    tpu.vector_store %arg10[%c24, %c0_21], %88 {strides = array<i32>} : memref<64x32xf32, #tpu.memory_space<vmem>>, vector<8x32xf32>,
    %90 = vector.extract_strided_slice %7 {offsets = [32, 0], sizes = [8, 128], strides = [1, 1]} : vector<64x128xf32> to vector<8x128xf32>
    %91 = arith.truncf %88 : vector<8x32xf32> to vector<8x32xbf16>
    %cst_22 = arith.constant dense<0.000000e+00> : vector<8x128xf32>
    %92 = tpu.matmul %91, %1, %cst_22 {dimension_numbers = #tpu.dot_dimension_numbers<[1], [0], [0], [1], [0, 0, 1, 1], [], []>} : vector<8x32xbf16>, vector<32x128xbf16>, vector<8x128xf32> -> vector<8x128xf32>
    %93 = arith.addf %90, %92 : vector<8x128xf32>
    %94 = arith.negf %93 : vector<8x128xf32>
    %95 = math.exp %94 : vector<8x128xf32>
    %cst_23 = arith.constant 1.000000e+00 : f32
    %96 = vector.broadcast %cst_23 : f32 to vector<8x128xf32>
    %97 = arith.addf %96, %95 : vector<8x128xf32>
    %98 = arith.divf %96, %97 : vector<8x128xf32>
    %99 = math.tanh %93 : vector<8x128xf32>
    %100 = vector.extract_strided_slice %98 {offsets = [0, 0], sizes = [8, 32], strides = [1, 1]} : vector<8x128xf32> to vector<8x32xf32>
    %101 = vector.extract_strided_slice %98 {offsets = [0, 32], sizes = [8, 32], strides = [1, 1]} : vector<8x128xf32> to vector<8x32xf32>
    %102 = vector.extract_strided_slice %98 {offsets = [0, 96], sizes = [8, 32], strides = [1, 1]} : vector<8x128xf32> to vector<8x32xf32>
    %103 = vector.extract_strided_slice %99 {offsets = [0, 64], sizes = [8, 32], strides = [1, 1]} : vector<8x128xf32> to vector<8x32xf32>
    %104 = arith.mulf %101, %86 : vector<8x32xf32>
    %105 = arith.mulf %100, %103 : vector<8x32xf32>
    %106 = arith.addf %104, %105 : vector<8x32xf32>
    %107 = math.tanh %106 : vector<8x32xf32>
    %108 = arith.mulf %102, %107 : vector<8x32xf32>
    %c32 = arith.constant 32 : index
    %c0_24 = arith.constant 0 : index
    %109 = vector.load %arg10[%c32, %c0_24] : memref<64x32xf32, #tpu.memory_space<vmem>>, vector<8x32xf32>
    tpu.vector_store %arg10[%c32, %c0_24], %108 {strides = array<i32>} : memref<64x32xf32, #tpu.memory_space<vmem>>, vector<8x32xf32>,
    %110 = vector.extract_strided_slice %7 {offsets = [40, 0], sizes = [8, 128], strides = [1, 1]} : vector<64x128xf32> to vector<8x128xf32>
    %111 = arith.truncf %108 : vector<8x32xf32> to vector<8x32xbf16>
    %cst_25 = arith.constant dense<0.000000e+00> : vector<8x128xf32>
    %112 = tpu.matmul %111, %1, %cst_25 {dimension_numbers = #tpu.dot_dimension_numbers<[1], [0], [0], [1], [0, 0, 1, 1], [], []>} : vector<8x32xbf16>, vector<32x128xbf16>, vector<8x128xf32> -> vector<8x128xf32>
    %113 = arith.addf %110, %112 : vector<8x128xf32>
    %114 = arith.negf %113 : vector<8x128xf32>
    %115 = math.exp %114 : vector<8x128xf32>
    %cst_26 = arith.constant 1.000000e+00 : f32
    %116 = vector.broadcast %cst_26 : f32 to vector<8x128xf32>
    %117 = arith.addf %116, %115 : vector<8x128xf32>
    %118 = arith.divf %116, %117 : vector<8x128xf32>
    %119 = math.tanh %113 : vector<8x128xf32>
    %120 = vector.extract_strided_slice %118 {offsets = [0, 0], sizes = [8, 32], strides = [1, 1]} : vector<8x128xf32> to vector<8x32xf32>
    %121 = vector.extract_strided_slice %118 {offsets = [0, 32], sizes = [8, 32], strides = [1, 1]} : vector<8x128xf32> to vector<8x32xf32>
    %122 = vector.extract_strided_slice %118 {offsets = [0, 96], sizes = [8, 32], strides = [1, 1]} : vector<8x128xf32> to vector<8x32xf32>
    %123 = vector.extract_strided_slice %119 {offsets = [0, 64], sizes = [8, 32], strides = [1, 1]} : vector<8x128xf32> to vector<8x32xf32>
    %124 = arith.mulf %121, %106 : vector<8x32xf32>
    %125 = arith.mulf %120, %123 : vector<8x32xf32>
    %126 = arith.addf %124, %125 : vector<8x32xf32>
    %127 = math.tanh %126 : vector<8x32xf32>
    %128 = arith.mulf %122, %127 : vector<8x32xf32>
    %c40 = arith.constant 40 : index
    %c0_27 = arith.constant 0 : index
    %129 = vector.load %arg10[%c40, %c0_27] : memref<64x32xf32, #tpu.memory_space<vmem>>, vector<8x32xf32>
    tpu.vector_store %arg10[%c40, %c0_27], %128 {strides = array<i32>} : memref<64x32xf32, #tpu.memory_space<vmem>>, vector<8x32xf32>,
    %130 = vector.extract_strided_slice %7 {offsets = [48, 0], sizes = [8, 128], strides = [1, 1]} : vector<64x128xf32> to vector<8x128xf32>
    %131 = arith.truncf %128 : vector<8x32xf32> to vector<8x32xbf16>
    %cst_28 = arith.constant dense<0.000000e+00> : vector<8x128xf32>
    %132 = tpu.matmul %131, %1, %cst_28 {dimension_numbers = #tpu.dot_dimension_numbers<[1], [0], [0], [1], [0, 0, 1, 1], [], []>} : vector<8x32xbf16>, vector<32x128xbf16>, vector<8x128xf32> -> vector<8x128xf32>
    %133 = arith.addf %130, %132 : vector<8x128xf32>
    %134 = arith.negf %133 : vector<8x128xf32>
    %135 = math.exp %134 : vector<8x128xf32>
    %cst_29 = arith.constant 1.000000e+00 : f32
    %136 = vector.broadcast %cst_29 : f32 to vector<8x128xf32>
    %137 = arith.addf %136, %135 : vector<8x128xf32>
    %138 = arith.divf %136, %137 : vector<8x128xf32>
    %139 = math.tanh %133 : vector<8x128xf32>
    %140 = vector.extract_strided_slice %138 {offsets = [0, 0], sizes = [8, 32], strides = [1, 1]} : vector<8x128xf32> to vector<8x32xf32>
    %141 = vector.extract_strided_slice %138 {offsets = [0, 32], sizes = [8, 32], strides = [1, 1]} : vector<8x128xf32> to vector<8x32xf32>
    %142 = vector.extract_strided_slice %138 {offsets = [0, 96], sizes = [8, 32], strides = [1, 1]} : vector<8x128xf32> to vector<8x32xf32>
    %143 = vector.extract_strided_slice %139 {offsets = [0, 64], sizes = [8, 32], strides = [1, 1]} : vector<8x128xf32> to vector<8x32xf32>
    %144 = arith.mulf %141, %126 : vector<8x32xf32>
    %145 = arith.mulf %140, %143 : vector<8x32xf32>
    %146 = arith.addf %144, %145 : vector<8x32xf32>
    %147 = math.tanh %146 : vector<8x32xf32>
    %148 = arith.mulf %142, %147 : vector<8x32xf32>
    %c48 = arith.constant 48 : index
    %c0_30 = arith.constant 0 : index
    %149 = vector.load %arg10[%c48, %c0_30] : memref<64x32xf32, #tpu.memory_space<vmem>>, vector<8x32xf32>
    tpu.vector_store %arg10[%c48, %c0_30], %148 {strides = array<i32>} : memref<64x32xf32, #tpu.memory_space<vmem>>, vector<8x32xf32>,
    %150 = vector.extract_strided_slice %7 {offsets = [56, 0], sizes = [8, 128], strides = [1, 1]} : vector<64x128xf32> to vector<8x128xf32>
    %151 = arith.truncf %148 : vector<8x32xf32> to vector<8x32xbf16>
    %cst_31 = arith.constant dense<0.000000e+00> : vector<8x128xf32>
    %152 = tpu.matmul %151, %1, %cst_31 {dimension_numbers = #tpu.dot_dimension_numbers<[1], [0], [0], [1], [0, 0, 1, 1], [], []>} : vector<8x32xbf16>, vector<32x128xbf16>, vector<8x128xf32> -> vector<8x128xf32>
    %153 = arith.addf %150, %152 : vector<8x128xf32>
    %154 = arith.negf %153 : vector<8x128xf32>
    %155 = math.exp %154 : vector<8x128xf32>
    %cst_32 = arith.constant 1.000000e+00 : f32
    %156 = vector.broadcast %cst_32 : f32 to vector<8x128xf32>
    %157 = arith.addf %156, %155 : vector<8x128xf32>
    %158 = arith.divf %156, %157 : vector<8x128xf32>
    %159 = math.tanh %153 : vector<8x128xf32>
    %160 = vector.extract_strided_slice %158 {offsets = [0, 0], sizes = [8, 32], strides = [1, 1]} : vector<8x128xf32> to vector<8x32xf32>
    %161 = vector.extract_strided_slice %158 {offsets = [0, 32], sizes = [8, 32], strides = [1, 1]} : vector<8x128xf32> to vector<8x32xf32>
    %162 = vector.extract_strided_slice %158 {offsets = [0, 96], sizes = [8, 32], strides = [1, 1]} : vector<8x128xf32> to vector<8x32xf32>
    %163 = vector.extract_strided_slice %159 {offsets = [0, 64], sizes = [8, 32], strides = [1, 1]} : vector<8x128xf32> to vector<8x32xf32>
    %164 = arith.mulf %161, %146 : vector<8x32xf32>
    %165 = arith.mulf %160, %163 : vector<8x32xf32>
    %166 = arith.addf %164, %165 : vector<8x32xf32>
    %167 = math.tanh %166 : vector<8x32xf32>
    %168 = arith.mulf %162, %167 : vector<8x32xf32>
    %c56 = arith.constant 56 : index
    %c0_33 = arith.constant 0 : index
    %169 = vector.load %arg10[%c56, %c0_33] : memref<64x32xf32, #tpu.memory_space<vmem>>, vector<8x32xf32>
    tpu.vector_store %arg10[%c56, %c0_33], %168 {strides = array<i32>} : memref<64x32xf32, #tpu.memory_space<vmem>>, vector<8x32xf32>,
    %c0_34 = arith.constant 0 : index
    %c0_35 = arith.constant 0 : index
    %170 = vector.load %arg4[%c0_34, %c0_35] : memref<32x128xbf16, #tpu.memory_space<vmem>>, vector<32x128xbf16>
    %c0_36 = arith.constant 0 : index
    %c0_37 = arith.constant 0 : index
    %171 = vector.load %arg5[%c0_36, %c0_37] : memref<32x128xbf16, #tpu.memory_space<vmem>>, vector<32x128xbf16>
    %c0_38 = arith.constant 0 : index
    %c0_39 = arith.constant 0 : index
    %172 = vector.load %arg6[%c0_38, %c0_39] : memref<1x128xf32, #tpu.memory_space<vmem>>, vector<1x128xf32>
    %c0_40 = arith.constant 0 : index
    %c0_41 = arith.constant 0 : index
    %173 = vector.load %arg10[%c0_40, %c0_41] : memref<64x32xf32, #tpu.memory_space<vmem>>, vector<64x32xf32>
    %174 = arith.truncf %173 : vector<64x32xf32> to vector<64x32xbf16>
    %cst_42 = arith.constant dense<0.000000e+00> : vector<64x128xf32>
    %175 = tpu.matmul %174, %170, %cst_42 {dimension_numbers = #tpu.dot_dimension_numbers<[1], [0], [0], [1], [0, 0, 1, 1], [], []>} : vector<64x32xbf16>, vector<32x128xbf16>, vector<64x128xf32> -> vector<64x128xf32>
    %176 = vector.broadcast %172 : vector<1x128xf32> to vector<64x128xf32>
    %177 = arith.addf %175, %176 : vector<64x128xf32>
    %cst_43 = arith.constant 0.000000e+00 : f32
    %178 = vector.broadcast %cst_43 : f32 to vector<8x32xf32>
    %cst_44 = arith.constant 0.000000e+00 : f32
    %179 = vector.broadcast %cst_44 : f32 to vector<8x32xf32>
    %180 = vector.extract_strided_slice %177 {offsets = [0, 0], sizes = [8, 128], strides = [1, 1]} : vector<64x128xf32> to vector<8x128xf32>
    %181 = arith.truncf %178 : vector<8x32xf32> to vector<8x32xbf16>
    %cst_45 = arith.constant dense<0.000000e+00> : vector<8x128xf32>
    %182 = tpu.matmul %181, %171, %cst_45 {dimension_numbers = #tpu.dot_dimension_numbers<[1], [0], [0], [1], [0, 0, 1, 1], [], []>} : vector<8x32xbf16>, vector<32x128xbf16>, vector<8x128xf32> -> vector<8x128xf32>
    %183 = arith.addf %180, %182 : vector<8x128xf32>
    %184 = arith.negf %183 : vector<8x128xf32>
    %185 = math.exp %184 : vector<8x128xf32>
    %cst_46 = arith.constant 1.000000e+00 : f32
    %186 = vector.broadcast %cst_46 : f32 to vector<8x128xf32>
    %187 = arith.addf %186, %185 : vector<8x128xf32>
    %188 = arith.divf %186, %187 : vector<8x128xf32>
    %189 = math.tanh %183 : vector<8x128xf32>
    %190 = vector.extract_strided_slice %188 {offsets = [0, 0], sizes = [8, 32], strides = [1, 1]} : vector<8x128xf32> to vector<8x32xf32>
    %191 = vector.extract_strided_slice %188 {offsets = [0, 32], sizes = [8, 32], strides = [1, 1]} : vector<8x128xf32> to vector<8x32xf32>
    %192 = vector.extract_strided_slice %188 {offsets = [0, 96], sizes = [8, 32], strides = [1, 1]} : vector<8x128xf32> to vector<8x32xf32>
    %193 = vector.extract_strided_slice %189 {offsets = [0, 64], sizes = [8, 32], strides = [1, 1]} : vector<8x128xf32> to vector<8x32xf32>
    %194 = arith.mulf %191, %179 : vector<8x32xf32>
    %195 = arith.mulf %190, %193 : vector<8x32xf32>
    %196 = arith.addf %194, %195 : vector<8x32xf32>
    %197 = math.tanh %196 : vector<8x32xf32>
    %198 = arith.mulf %192, %197 : vector<8x32xf32>
    %199 = vector.extract_strided_slice %177 {offsets = [8, 0], sizes = [8, 128], strides = [1, 1]} : vector<64x128xf32> to vector<8x128xf32>
    %200 = arith.truncf %198 : vector<8x32xf32> to vector<8x32xbf16>
    %cst_47 = arith.constant dense<0.000000e+00> : vector<8x128xf32>
    %201 = tpu.matmul %200, %171, %cst_47 {dimension_numbers = #tpu.dot_dimension_numbers<[1], [0], [0], [1], [0, 0, 1, 1], [], []>} : vector<8x32xbf16>, vector<32x128xbf16>, vector<8x128xf32> -> vector<8x128xf32>
    %202 = arith.addf %199, %201 : vector<8x128xf32>
    %203 = arith.negf %202 : vector<8x128xf32>
    %204 = math.exp %203 : vector<8x128xf32>
    %cst_48 = arith.constant 1.000000e+00 : f32
    %205 = vector.broadcast %cst_48 : f32 to vector<8x128xf32>
    %206 = arith.addf %205, %204 : vector<8x128xf32>
    %207 = arith.divf %205, %206 : vector<8x128xf32>
    %208 = math.tanh %202 : vector<8x128xf32>
    %209 = vector.extract_strided_slice %207 {offsets = [0, 0], sizes = [8, 32], strides = [1, 1]} : vector<8x128xf32> to vector<8x32xf32>
    %210 = vector.extract_strided_slice %207 {offsets = [0, 32], sizes = [8, 32], strides = [1, 1]} : vector<8x128xf32> to vector<8x32xf32>
    %211 = vector.extract_strided_slice %207 {offsets = [0, 96], sizes = [8, 32], strides = [1, 1]} : vector<8x128xf32> to vector<8x32xf32>
    %212 = vector.extract_strided_slice %208 {offsets = [0, 64], sizes = [8, 32], strides = [1, 1]} : vector<8x128xf32> to vector<8x32xf32>
    %213 = arith.mulf %210, %196 : vector<8x32xf32>
    %214 = arith.mulf %209, %212 : vector<8x32xf32>
    %215 = arith.addf %213, %214 : vector<8x32xf32>
    %216 = math.tanh %215 : vector<8x32xf32>
    %217 = arith.mulf %211, %216 : vector<8x32xf32>
    %218 = vector.extract_strided_slice %177 {offsets = [16, 0], sizes = [8, 128], strides = [1, 1]} : vector<64x128xf32> to vector<8x128xf32>
    %219 = arith.truncf %217 : vector<8x32xf32> to vector<8x32xbf16>
    %cst_49 = arith.constant dense<0.000000e+00> : vector<8x128xf32>
    %220 = tpu.matmul %219, %171, %cst_49 {dimension_numbers = #tpu.dot_dimension_numbers<[1], [0], [0], [1], [0, 0, 1, 1], [], []>} : vector<8x32xbf16>, vector<32x128xbf16>, vector<8x128xf32> -> vector<8x128xf32>
    %221 = arith.addf %218, %220 : vector<8x128xf32>
    %222 = arith.negf %221 : vector<8x128xf32>
    %223 = math.exp %222 : vector<8x128xf32>
    %cst_50 = arith.constant 1.000000e+00 : f32
    %224 = vector.broadcast %cst_50 : f32 to vector<8x128xf32>
    %225 = arith.addf %224, %223 : vector<8x128xf32>
    %226 = arith.divf %224, %225 : vector<8x128xf32>
    %227 = math.tanh %221 : vector<8x128xf32>
    %228 = vector.extract_strided_slice %226 {offsets = [0, 0], sizes = [8, 32], strides = [1, 1]} : vector<8x128xf32> to vector<8x32xf32>
    %229 = vector.extract_strided_slice %226 {offsets = [0, 32], sizes = [8, 32], strides = [1, 1]} : vector<8x128xf32> to vector<8x32xf32>
    %230 = vector.extract_strided_slice %226 {offsets = [0, 96], sizes = [8, 32], strides = [1, 1]} : vector<8x128xf32> to vector<8x32xf32>
    %231 = vector.extract_strided_slice %227 {offsets = [0, 64], sizes = [8, 32], strides = [1, 1]} : vector<8x128xf32> to vector<8x32xf32>
    %232 = arith.mulf %229, %215 : vector<8x32xf32>
    %233 = arith.mulf %228, %231 : vector<8x32xf32>
    %234 = arith.addf %232, %233 : vector<8x32xf32>
    %235 = math.tanh %234 : vector<8x32xf32>
    %236 = arith.mulf %230, %235 : vector<8x32xf32>
    %237 = vector.extract_strided_slice %177 {offsets = [24, 0], sizes = [8, 128], strides = [1, 1]} : vector<64x128xf32> to vector<8x128xf32>
    %238 = arith.truncf %236 : vector<8x32xf32> to vector<8x32xbf16>
    %cst_51 = arith.constant dense<0.000000e+00> : vector<8x128xf32>
    %239 = tpu.matmul %238, %171, %cst_51 {dimension_numbers = #tpu.dot_dimension_numbers<[1], [0], [0], [1], [0, 0, 1, 1], [], []>} : vector<8x32xbf16>, vector<32x128xbf16>, vector<8x128xf32> -> vector<8x128xf32>
    %240 = arith.addf %237, %239 : vector<8x128xf32>
    %241 = arith.negf %240 : vector<8x128xf32>
    %242 = math.exp %241 : vector<8x128xf32>
    %cst_52 = arith.constant 1.000000e+00 : f32
    %243 = vector.broadcast %cst_52 : f32 to vector<8x128xf32>
    %244 = arith.addf %243, %242 : vector<8x128xf32>
    %245 = arith.divf %243, %244 : vector<8x128xf32>
    %246 = math.tanh %240 : vector<8x128xf32>
    %247 = vector.extract_strided_slice %245 {offsets = [0, 0], sizes = [8, 32], strides = [1, 1]} : vector<8x128xf32> to vector<8x32xf32>
    %248 = vector.extract_strided_slice %245 {offsets = [0, 32], sizes = [8, 32], strides = [1, 1]} : vector<8x128xf32> to vector<8x32xf32>
    %249 = vector.extract_strided_slice %245 {offsets = [0, 96], sizes = [8, 32], strides = [1, 1]} : vector<8x128xf32> to vector<8x32xf32>
    %250 = vector.extract_strided_slice %246 {offsets = [0, 64], sizes = [8, 32], strides = [1, 1]} : vector<8x128xf32> to vector<8x32xf32>
    %251 = arith.mulf %248, %234 : vector<8x32xf32>
    %252 = arith.mulf %247, %250 : vector<8x32xf32>
    %253 = arith.addf %251, %252 : vector<8x32xf32>
    %254 = math.tanh %253 : vector<8x32xf32>
    %255 = arith.mulf %249, %254 : vector<8x32xf32>
    %256 = vector.extract_strided_slice %177 {offsets = [32, 0], sizes = [8, 128], strides = [1, 1]} : vector<64x128xf32> to vector<8x128xf32>
    %257 = arith.truncf %255 : vector<8x32xf32> to vector<8x32xbf16>
    %cst_53 = arith.constant dense<0.000000e+00> : vector<8x128xf32>
    %258 = tpu.matmul %257, %171, %cst_53 {dimension_numbers = #tpu.dot_dimension_numbers<[1], [0], [0], [1], [0, 0, 1, 1], [], []>} : vector<8x32xbf16>, vector<32x128xbf16>, vector<8x128xf32> -> vector<8x128xf32>
    %259 = arith.addf %256, %258 : vector<8x128xf32>
    %260 = arith.negf %259 : vector<8x128xf32>
    %261 = math.exp %260 : vector<8x128xf32>
    %cst_54 = arith.constant 1.000000e+00 : f32
    %262 = vector.broadcast %cst_54 : f32 to vector<8x128xf32>
    %263 = arith.addf %262, %261 : vector<8x128xf32>
    %264 = arith.divf %262, %263 : vector<8x128xf32>
    %265 = math.tanh %259 : vector<8x128xf32>
    %266 = vector.extract_strided_slice %264 {offsets = [0, 0], sizes = [8, 32], strides = [1, 1]} : vector<8x128xf32> to vector<8x32xf32>
    %267 = vector.extract_strided_slice %264 {offsets = [0, 32], sizes = [8, 32], strides = [1, 1]} : vector<8x128xf32> to vector<8x32xf32>
    %268 = vector.extract_strided_slice %264 {offsets = [0, 96], sizes = [8, 32], strides = [1, 1]} : vector<8x128xf32> to vector<8x32xf32>
    %269 = vector.extract_strided_slice %265 {offsets = [0, 64], sizes = [8, 32], strides = [1, 1]} : vector<8x128xf32> to vector<8x32xf32>
    %270 = arith.mulf %267, %253 : vector<8x32xf32>
    %271 = arith.mulf %266, %269 : vector<8x32xf32>
    %272 = arith.addf %270, %271 : vector<8x32xf32>
    %273 = math.tanh %272 : vector<8x32xf32>
    %274 = arith.mulf %268, %273 : vector<8x32xf32>
    %275 = vector.extract_strided_slice %177 {offsets = [40, 0], sizes = [8, 128], strides = [1, 1]} : vector<64x128xf32> to vector<8x128xf32>
    %276 = arith.truncf %274 : vector<8x32xf32> to vector<8x32xbf16>
    %cst_55 = arith.constant dense<0.000000e+00> : vector<8x128xf32>
    %277 = tpu.matmul %276, %171, %cst_55 {dimension_numbers = #tpu.dot_dimension_numbers<[1], [0], [0], [1], [0, 0, 1, 1], [], []>} : vector<8x32xbf16>, vector<32x128xbf16>, vector<8x128xf32> -> vector<8x128xf32>
    %278 = arith.addf %275, %277 : vector<8x128xf32>
    %279 = arith.negf %278 : vector<8x128xf32>
    %280 = math.exp %279 : vector<8x128xf32>
    %cst_56 = arith.constant 1.000000e+00 : f32
    %281 = vector.broadcast %cst_56 : f32 to vector<8x128xf32>
    %282 = arith.addf %281, %280 : vector<8x128xf32>
    %283 = arith.divf %281, %282 : vector<8x128xf32>
    %284 = math.tanh %278 : vector<8x128xf32>
    %285 = vector.extract_strided_slice %283 {offsets = [0, 0], sizes = [8, 32], strides = [1, 1]} : vector<8x128xf32> to vector<8x32xf32>
    %286 = vector.extract_strided_slice %283 {offsets = [0, 32], sizes = [8, 32], strides = [1, 1]} : vector<8x128xf32> to vector<8x32xf32>
    %287 = vector.extract_strided_slice %283 {offsets = [0, 96], sizes = [8, 32], strides = [1, 1]} : vector<8x128xf32> to vector<8x32xf32>
    %288 = vector.extract_strided_slice %284 {offsets = [0, 64], sizes = [8, 32], strides = [1, 1]} : vector<8x128xf32> to vector<8x32xf32>
    %289 = arith.mulf %286, %272 : vector<8x32xf32>
    %290 = arith.mulf %285, %288 : vector<8x32xf32>
    %291 = arith.addf %289, %290 : vector<8x32xf32>
    %292 = math.tanh %291 : vector<8x32xf32>
    %293 = arith.mulf %287, %292 : vector<8x32xf32>
    %294 = vector.extract_strided_slice %177 {offsets = [48, 0], sizes = [8, 128], strides = [1, 1]} : vector<64x128xf32> to vector<8x128xf32>
    %295 = arith.truncf %293 : vector<8x32xf32> to vector<8x32xbf16>
    %cst_57 = arith.constant dense<0.000000e+00> : vector<8x128xf32>
    %296 = tpu.matmul %295, %171, %cst_57 {dimension_numbers = #tpu.dot_dimension_numbers<[1], [0], [0], [1], [0, 0, 1, 1], [], []>} : vector<8x32xbf16>, vector<32x128xbf16>, vector<8x128xf32> -> vector<8x128xf32>
    %297 = arith.addf %294, %296 : vector<8x128xf32>
    %298 = arith.negf %297 : vector<8x128xf32>
    %299 = math.exp %298 : vector<8x128xf32>
    %cst_58 = arith.constant 1.000000e+00 : f32
    %300 = vector.broadcast %cst_58 : f32 to vector<8x128xf32>
    %301 = arith.addf %300, %299 : vector<8x128xf32>
    %302 = arith.divf %300, %301 : vector<8x128xf32>
    %303 = math.tanh %297 : vector<8x128xf32>
    %304 = vector.extract_strided_slice %302 {offsets = [0, 0], sizes = [8, 32], strides = [1, 1]} : vector<8x128xf32> to vector<8x32xf32>
    %305 = vector.extract_strided_slice %302 {offsets = [0, 32], sizes = [8, 32], strides = [1, 1]} : vector<8x128xf32> to vector<8x32xf32>
    %306 = vector.extract_strided_slice %302 {offsets = [0, 96], sizes = [8, 32], strides = [1, 1]} : vector<8x128xf32> to vector<8x32xf32>
    %307 = vector.extract_strided_slice %303 {offsets = [0, 64], sizes = [8, 32], strides = [1, 1]} : vector<8x128xf32> to vector<8x32xf32>
    %308 = arith.mulf %305, %291 : vector<8x32xf32>
    %309 = arith.mulf %304, %307 : vector<8x32xf32>
    %310 = arith.addf %308, %309 : vector<8x32xf32>
    %311 = math.tanh %310 : vector<8x32xf32>
    %312 = arith.mulf %306, %311 : vector<8x32xf32>
    %313 = vector.extract_strided_slice %177 {offsets = [56, 0], sizes = [8, 128], strides = [1, 1]} : vector<64x128xf32> to vector<8x128xf32>
    %314 = arith.truncf %312 : vector<8x32xf32> to vector<8x32xbf16>
    %cst_59 = arith.constant dense<0.000000e+00> : vector<8x128xf32>
    %315 = tpu.matmul %314, %171, %cst_59 {dimension_numbers = #tpu.dot_dimension_numbers<[1], [0], [0], [1], [0, 0, 1, 1], [], []>} : vector<8x32xbf16>, vector<32x128xbf16>, vector<8x128xf32> -> vector<8x128xf32>
    %316 = arith.addf %313, %315 : vector<8x128xf32>
    %317 = arith.negf %316 : vector<8x128xf32>
    %318 = math.exp %317 : vector<8x128xf32>
    %cst_60 = arith.constant 1.000000e+00 : f32
    %319 = vector.broadcast %cst_60 : f32 to vector<8x128xf32>
    %320 = arith.addf %319, %318 : vector<8x128xf32>
    %321 = arith.divf %319, %320 : vector<8x128xf32>
    %322 = math.tanh %316 : vector<8x128xf32>
    %323 = vector.extract_strided_slice %321 {offsets = [0, 0], sizes = [8, 32], strides = [1, 1]} : vector<8x128xf32> to vector<8x32xf32>
    %324 = vector.extract_strided_slice %321 {offsets = [0, 32], sizes = [8, 32], strides = [1, 1]} : vector<8x128xf32> to vector<8x32xf32>
    %325 = vector.extract_strided_slice %321 {offsets = [0, 96], sizes = [8, 32], strides = [1, 1]} : vector<8x128xf32> to vector<8x32xf32>
    %326 = vector.extract_strided_slice %322 {offsets = [0, 64], sizes = [8, 32], strides = [1, 1]} : vector<8x128xf32> to vector<8x32xf32>
    %327 = arith.mulf %324, %310 : vector<8x32xf32>
    %328 = arith.mulf %323, %326 : vector<8x32xf32>
    %329 = arith.addf %327, %328 : vector<8x32xf32>
    %330 = math.tanh %329 : vector<8x32xf32>
    %331 = arith.mulf %325, %330 : vector<8x32xf32>
    %332 = arith.truncf %331 : vector<8x32xf32> to vector<8x32xbf16>
    %c0_61 = arith.constant 0 : index
    %c0_62 = arith.constant 0 : index
    %333 = vector.load %arg7[%c0_61, %c0_62] : memref<32x4xbf16, #tpu.memory_space<vmem>>, vector<32x4xbf16>
    %cst_63 = arith.constant dense<0.000000e+00> : vector<8x4xf32>
    %334 = tpu.matmul %332, %333, %cst_63 {dimension_numbers = #tpu.dot_dimension_numbers<[1], [0], [0], [1], [0, 0, 1, 1], [], []>} : vector<8x32xbf16>, vector<32x4xbf16>, vector<8x4xf32> -> vector<8x4xf32>
    %c0_64 = arith.constant 0 : index
    %c0_65 = arith.constant 0 : index
    %335 = vector.load %arg8[%c0_64, %c0_65] : memref<1x4xf32, #tpu.memory_space<vmem>>, vector<1x4xf32>
    %336 = vector.broadcast %335 : vector<1x4xf32> to vector<8x4xf32>
    %337 = arith.addf %334, %336 : vector<8x4xf32>
    %c0_66 = arith.constant 0 : index
    %c0_67 = arith.constant 0 : index
    %338 = vector.load %arg9[%c0_66, %c0_67] : memref<8x4xf32, #tpu.memory_space<vmem>>, vector<8x4xf32>
    tpu.vector_store %arg9[%c0_66, %c0_67], %337 {strides = array<i32>} : memref<8x4xf32, #tpu.memory_space<vmem>>, vector<8x4xf32>,
    return
  }
}

</mosaic_0001>

<llo_original>
// kernel: tpu_custom_call.1
$region0: #{tpu_custom_call.1}
  #allocation0 [shape = 'u32[]', space=smem, size = 0x4, offset = 0x4, fixed_abs, tag = 'smem constant byte address 0x4 - core index']
  #allocation1 [shape = 'u32[144,128]{1,0:T(1,128)}', space=vmem, size = 0x12000, scoped, tag = 'internal scratch']
  #allocation2 [shape = 'f32[64,32]{1,0:T(8,128)}', space=vmem, size = 0x8000, scoped, tag = 'scratch operand']
  %s0 = inlined_call_operand.vmem [shape: f32[64,4], index: 0, kind: input, shape index: {}]
  %s1 = inlined_call_operand.vmem [shape: bf16[4,128], index: 1, kind: input, shape index: {}]
  %s2 = inlined_call_operand.vmem [shape: bf16[32,128], index: 2, kind: input, shape index: {}]
  %s3 = inlined_call_operand.vmem [shape: f32[1,128], index: 3, kind: input, shape index: {}]
  %s4 = inlined_call_operand.vmem [shape: bf16[32,128], index: 4, kind: input, shape index: {}]
  %s5 = inlined_call_operand.vmem [shape: bf16[32,128], index: 5, kind: input, shape index: {}]
  %s6 = inlined_call_operand.vmem [shape: f32[1,128], index: 6, kind: input, shape index: {}]
  %s7 = inlined_call_operand.vmem [shape: bf16[32,4], index: 7, kind: input, shape index: {}]
  %s8 = inlined_call_operand.vmem [shape: f32[1,4], index: 8, kind: input, shape index: {}]
  %s9 = inlined_call_operand.vmem [shape: f32[8,4], index: 9, kind: output, shape index: {}]
  %s10 = sld [smem:[#allocation0]]
  $region46: #{tpu_custom_call.1} parent=0
    _
  %s12 = ssub.s32 1, %s10
  %s13 = scalar_select 0, %s12, %s10
  // Predicated region
  $region2: #{tpu_custom_call.1} parent=0 // pred_check
    _
  $region3: #{tpu_custom_call.1} parent=0 // pred_check_branch
    %15 = sbr.rel (0) target = $region5
  $region4: #{tpu_custom_call.1} parent=0 // pred_region
    _
  $region5: #{tpu_custom_call.1} parent=0 // pred_fallthru
    _
  // Predicated region
  $region6: #{tpu_custom_call.1} parent=0 // pred_check
    _
  $region7: #{tpu_custom_call.1} parent=0 // pred_check_branch
    %17 = sbr.rel (0) target = $region9
  $region8: #{tpu_custom_call.1} parent=0 // pred_region
    _
  $region9: #{tpu_custom_call.1} parent=0 // pred_fallthru
    _
  // Predicated region
  $region10: #{tpu_custom_call.1} parent=0 // pred_check
    _
  $region11: #{tpu_custom_call.1} parent=0 // pred_check_branch
    %19 = sbr.rel (0) target = $region13
  $region12: #{tpu_custom_call.1} parent=0 // pred_region
    _
  $region13: #{tpu_custom_call.1} parent=0 // pred_fallthru
    _
  // Predicated region
  $region14: #{tpu_custom_call.1} parent=0 // pred_check
    _
  $region15: #{tpu_custom_call.1} parent=0 // pred_check_branch
    %21 = sbr.rel (0) target = $region17
  $region16: #{tpu_custom_call.1} parent=0 // pred_region
    _
  $region17: #{tpu_custom_call.1} parent=0 // pred_fallthru
    _
  // Predicated region
  $region18: #{tpu_custom_call.1} parent=0 // pred_check
    _
  $region19: #{tpu_custom_call.1} parent=0 // pred_check_branch
    %23 = sbr.rel (0) target = $region21
  $region20: #{tpu_custom_call.1} parent=0 // pred_region
    _
  $region21: #{tpu_custom_call.1} parent=0 // pred_fallthru
    _
  // Predicated region
  $region22: #{tpu_custom_call.1} parent=0 // pred_check
    _
  $region23: #{tpu_custom_call.1} parent=0 // pred_check_branch
    %25 = sbr.rel (0) target = $region25
  $region24: #{tpu_custom_call.1} parent=0 // pred_region
    _
  $region25: #{tpu_custom_call.1} parent=0 // pred_fallthru
    _
  // Predicated region
  $region26: #{tpu_custom_call.1} parent=0 // pred_check
    _
  $region27: #{tpu_custom_call.1} parent=0 // pred_check_branch
    %27 = sbr.rel (0) target = $region29
  $region28: #{tpu_custom_call.1} parent=0 // pred_region
    _
  $region29: #{tpu_custom_call.1} parent=0 // pred_fallthru
    _
  // Predicated region
  $region30: #{tpu_custom_call.1} parent=0 // pred_check
    _
  $region31: #{tpu_custom_call.1} parent=0 // pred_check_branch
    %29 = sbr.rel (0) target = $region33
  $region32: #{tpu_custom_call.1} parent=0 // pred_region
    _
  $region33: #{tpu_custom_call.1} parent=0 // pred_fallthru
    _
  // Predicated region
  $region34: #{tpu_custom_call.1} parent=0 // pred_check
    _
  $region35: #{tpu_custom_call.1} parent=0 // pred_check_branch
    %31 = sbr.rel (0) target = $region37
  $region36: #{tpu_custom_call.1} parent=0 // pred_region
    _
  $region37: #{tpu_custom_call.1} parent=0 // pred_fallthru
    _
  %v33 = vld [vmem:[%s1] sm:$0x3]
  %v34 = vld [vmem:[%s2] sm:$0xf]
  %v35 = vld [vmem:[%s2 + $0x4] sm:$0xf]
  %v36 = vld [vmem:[%s2 + $0x8] sm:$0xf]
  %v37 = vld [vmem:[%s2 + $0xc] sm:$0xf]
  %v38 = vld [vmem:[%s3] sm:$0x1]
  %v39 = vld [vmem:[%s0] sm:$0xff]
  %v40 = vld [vmem:[%s0 + $0x8] sm:$0xff]
  %v41 = vld [vmem:[%s0 + $0x10] sm:$0xff]
  %v42 = vld [vmem:[%s0 + $0x18] sm:$0xff]
  %v43 = vld [vmem:[%s0 + $0x20] sm:$0xff]
  %v44 = vld [vmem:[%s0 + $0x28] sm:$0xff]
  %v45 = vld [vmem:[%s0 + $0x30] sm:$0xff]
  %v46 = vld [vmem:[%s0 + $0x38] sm:$0xff]
  %v47 = vpack.c.bf16 %v40, %v39
  %v48 = vpack.c.bf16 %v42, %v41
  %v49 = vpack.c.bf16 %v44, %v43
  %v50 = vpack.c.bf16 %v46, %v45
  %v52 = vlaneseq
  %v53 = vshrl.u32 %v52, 7
  %v54 = vsub.s32 0, %v53
  %v55 = vrot.slane %v38, %v54
  %vm57 = vcmask 31744
  %v59 = vsel %vm57, %v47, 0
  %v62 = vsel %vm57, %v48, 0
  %v65 = vsel %vm57, %v49, 0
  %v68 = vsel %vm57, %v50, 0
  %vm70 = vcmask 1041408
  %v72 = vsel %vm70, %v33, 0
  %74 = vmatprep.subr.bf16.mxu0 0
  %75 = vmatpush1.bf16.msra.mxu0 %v72
  %76 = vmatprep.subr.bf16.mxu0 0
  %77 = vmatpush1.bf16.msra.mxu0 0
  %78 = vmatprep.subr.bf16.mxu0 0
  %79 = vmatpush1.bf16.msra.mxu0 0
  %80 = vmatprep.subr.bf16.mxu0 0
  %81 = vmatpush1.bf16.msra.mxu0 0
  %82 = vmatprep.subr.bf16.mxu0 0
  %83 = vmatpush1.bf16.msra.mxu0 0
  %84 = vmatprep.subr.bf16.mxu0 0
  %85 = vmatpush1.bf16.msra.mxu0 0
  %86 = vmatprep.subr.bf16.mxu0 0
  %87 = vmatpush1.bf16.msra.mxu0 0
  %88 = vmatprep.subr.bf16.mxu0 0
  %89 = vmatpush1.bf16.msra.mxu0 0
  %90 = vmatprep.subr.bf16.mxu0 0
  %91 = vmatpush1.bf16.msra.mxu0 0
  %92 = vmatprep.subr.bf16.mxu0 0
  %93 = vmatpush1.bf16.msra.mxu0 0
  %94 = vmatprep.subr.bf16.mxu0 0
  %95 = vmatpush1.bf16.msra.mxu0 0
  %96 = vmatprep.subr.bf16.mxu0 0
  %97 = vmatpush1.bf16.msra.mxu0 0
  %98 = vmatprep.subr.bf16.mxu0 0
  %99 = vmatpush1.bf16.msra.mxu0 0
  %100 = vmatprep.subr.bf16.mxu0 0
  %101 = vmatpush1.bf16.msra.mxu0 0
  %102 = vmatprep.subr.bf16.mxu0 0
  %103 = vmatpush1.bf16.msra.mxu0 0
  %104 = vmatprep.subr.bf16.mxu0 0
  %105 = vmatpush1.bf16.msra.mxu0 0
  %106 = vmatprep.mubr.bf16.mxu0 0
  %107 = vmatmul.mubr.bf16.gmra.mrb[0].mxu0 %v59
  %v108 = vpop.f32.mrb[0].mxu0
  %v109 = vadd.f32 %v55, %v108
  %v110 = vpop.f32.mrb[0].mxu0
  %v111 = vpop.f32.mrb[0].mxu0
  %v112 = vadd.f32 %v55, %v111
  %v113 = vpop.f32.mrb[0].mxu0
  %114 = vmatprep.mubr.bf16.mxu0 0
  %115 = vmatmul.mubr.bf16.gmra.mrb[0].mxu0 %v62
  %v116 = vpop.f32.mrb[0].mxu0
  %v117 = vadd.f32 %v55, %v116
  %v118 = vpop.f32.mrb[0].mxu0
  %v119 = vpop.f32.mrb[0].mxu0
  %v120 = vadd.f32 %v55, %v119
  %v121 = vpop.f32.mrb[0].mxu0
  %122 = vmatprep.mubr.bf16.mxu0 0
  %123 = vmatmul.mubr.bf16.gmra.mrb[0].mxu0 %v65
  %v124 = vpop.f32.mrb[0].mxu0
  %v125 = vadd.f32 %v55, %v124
  %v126 = vpop.f32.mrb[0].mxu0
  %v127 = vpop.f32.mrb[0].mxu0
  %v128 = vadd.f32 %v55, %v127
  %v129 = vpop.f32.mrb[0].mxu0
  %130 = vmatprep.mubr.bf16.mxu0 0
  %131 = vmatmul.mubr.bf16.gmra.mrb[0].mxu0 %v68
  %v132 = vpop.f32.mrb[0].mxu0
  %v133 = vadd.f32 %v55, %v132
  %v134 = vpop.f32.mrb[0].mxu0
  %v135 = vpop.f32.mrb[0].mxu0
  %v136 = vadd.f32 %v55, %v135
  %v137 = vpop.f32.mrb[0].mxu0
  %138 = vdwg.mxu0
  %v143 = vunpack.c.l.b16 %v34
  %v144 = vunpack.c.l.b16 %v35
  %v145 = vunpack.c.l.b16 %v36
  %v146 = vunpack.c.l.b16 %v37
  %v147 = vpack.c.b16 %v144, %v143
  %v148 = vpack.c.b16 %v146, %v145
  %vm151 = vcmask 261120
  %v153 = vsel %vm151, 0, 0
  %155 = vmatprep.subr.bf16.mxu0 0
  %156 = vmatpush1.bf16.msra.mxu0 %v147
  %157 = vmatprep.subr.bf16.mxu0 0
  %158 = vmatpush1.bf16.msra.mxu0 %v148
  %159 = vmatprep.subr.bf16.mxu0 0
  %160 = vmatpush1.bf16.msra.mxu0 0
  %161 = vmatprep.subr.bf16.mxu0 0
  %162 = vmatpush1.bf16.msra.mxu0 0
  %163 = vmatprep.subr.bf16.mxu0 0
  %164 = vmatpush1.bf16.msra.mxu0 0
  %165 = vmatprep.subr.bf16.mxu0 0
  %166 = vmatpush1.bf16.msra.mxu0 0
  %167 = vmatprep.subr.bf16.mxu0 0
  %168 = vmatpush1.bf16.msra.mxu0 0
  %169 = vmatprep.subr.bf16.mxu0 0
  %170 = vmatpush1.bf16.msra.mxu0 0
  %171 = vmatprep.subr.bf16.mxu0 0
  %172 = vmatpush1.bf16.msra.mxu0 0
  %173 = vmatprep.subr.bf16.mxu0 0
  %174 = vmatpush1.bf16.msra.mxu0 0
  %175 = vmatprep.subr.bf16.mxu0 0
  %176 = vmatpush1.bf16.msra.mxu0 0
  %177 = vmatprep.subr.bf16.mxu0 0
  %178 = vmatpush1.bf16.msra.mxu0 0
  %179 = vmatprep.subr.bf16.mxu0 0
  %180 = vmatpush1.bf16.msra.mxu0 0
  %181 = vmatprep.subr.bf16.mxu0 0
  %182 = vmatpush1.bf16.msra.mxu0 0
  %183 = vmatprep.subr.bf16.mxu0 0
  %184 = vmatpush1.bf16.msra.mxu0 0
  %185 = vmatprep.subr.bf16.mxu0 0
  %186 = vmatpush1.bf16.msra.mxu0 0
  %187 = vmatprep.mubr.bf16.mxu0 0
  %188 = vmatmul.mubr.bf16.gmra.mrb[0].mxu0 %v153
  %v189 = vpop.f32.mrb[0].mxu0
  %v190 = vadd.f32 0.0, %v189
  %v191 = vpop.f32.mrb[0].mxu0
  %v192 = vpop.f32.mrb[0].mxu0
  %v193 = vpop.f32.mrb[0].mxu0
  %194 = vdwg.mxu0
  %v195 = vadd.f32 %v109, %v190
  %v196 = vxor.u32 %v195, 2147483648
  %v197 = vmul.f32 %v196, 1.442695
  %v198 = vpow.pop %v197
  %v199 = vadd.f32 %v198, 1.0
  %v200 = vrcp.pop %v199
  %v201 = vmul.f32 1.0, %v200
  %v202 = vtanh.pop %v195
  %v203 = vmul.f32 %v201, 0.0
  %205 = vrot.lane.b32.xlu0 %v202, 64
  %v206 = vpop.permute.xlu0 %205
  %v208 = vmul.f32 %v201, %v206
  %210 = vrot.lane.b32.xlu0 %v208, 32
  %v211 = vpop.permute.xlu0 %210
  %v213 = vadd.f32 %v203, %v211
  %v214 = vtanh.pop %v213
  %216 = vrot.lane.b32.xlu0 %v214, 64
  %v217 = vpop.permute.xlu0 %216
  %v219 = vmul.f32 %v201, %v217
  %221 = vrot.lane.b32.xlu0 %v219, 32
  %v222 = vpop.permute.xlu0 %221
  %224 = vst.msk [vmem:[#allocation2] sm:$0xff] %vm151, %v222
  %v225 = vpack.c.bf16 %v219, %v219
  %227 = vrot.lane.b32.xlu0 %v225, 32
  %v228 = vpop.permute.xlu0 %227
  %v230 = vsel %vm151, %v228, 0
  %232 = vmatprep.subr.bf16.mxu0 0
  %233 = vmatpush1.bf16.msra.mxu0 %v147
  %234 = vmatprep.subr.bf16.mxu0 0
  %235 = vmatpush1.bf16.msra.mxu0 %v148
  %236 = vmatprep.subr.bf16.mxu0 0
  %237 = vmatpush1.bf16.msra.mxu0 0
  %238 = vmatprep.subr.bf16.mxu0 0
  %239 = vmatpush1.bf16.msra.mxu0 0
  %240 = vmatprep.subr.bf16.mxu0 0
  %241 = vmatpush1.bf16.msra.mxu0 0
  %242 = vmatprep.subr.bf16.mxu0 0
  %243 = vmatpush1.bf16.msra.mxu0 0
  %244 = vmatprep.subr.bf16.mxu0 0
  %245 = vmatpush1.bf16.msra.mxu0 0
  %246 = vmatprep.subr.bf16.mxu0 0
  %247 = vmatpush1.bf16.msra.mxu0 0
  %248 = vmatprep.subr.bf16.mxu0 0
  %249 = vmatpush1.bf16.msra.mxu0 0
  %250 = vmatprep.subr.bf16.mxu0 0
  %251 = vmatpush1.bf16.msra.mxu0 0
  %252 = vmatprep.subr.bf16.mxu0 0
  %253 = vmatpush1.bf16.msra.mxu0 0
  %254 = vmatprep.subr.bf16.mxu0 0
  %255 = vmatpush1.bf16.msra.mxu0 0
  %256 = vmatprep.subr.bf16.mxu0 0
  %257 = vmatpush1.bf16.msra.mxu0 0
  %258 = vmatprep.subr.bf16.mxu0 0
  %259 = vmatpush1.bf16.msra.mxu0 0
  %260 = vmatprep.subr.bf16.mxu0 0
  %261 = vmatpush1.bf16.msra.mxu0 0
  %262 = vmatprep.subr.bf16.mxu0 0
  %263 = vmatpush1.bf16.msra.mxu0 0
  %264 = vmatprep.mubr.bf16.mxu0 0
  %265 = vmatmul.mubr.bf16.gmra.mrb[0].mxu0 %v230
  %v266 = vpop.f32.mrb[0].mxu0
  %v267 = vadd.f32 0.0, %v266
  %v268 = vpop.f32.mrb[0].mxu0
  %v269 = vpop.f32.mrb[0].mxu0
  %v270 = vpop.f32.mrb[0].mxu0
  %271 = vdwg.mxu0
  %v272 = vadd.f32 %v112, %v267
  %v273 = vxor.u32 %v272, 2147483648
  %v274 = vmul.f32 %v273, 1.442695
  %v275 = vpow.pop %v274
  %v276 = vadd.f32 %v275, 1.0
  %v277 = vrcp.pop %v276
  %v278 = vmul.f32 1.0, %v277
  %v279 = vtanh.pop %v272
  %v280 = vmul.f32 %v278, %v213
  %282 = vrot.lane.b32.xlu0 %v279, 64
  %v283 = vpop.permute.xlu0 %282
  %v285 = vmul.f32 %v278, %v283
  %287 = vrot.lane.b32.xlu0 %v285, 32
  %v288 = vpop.permute.xlu0 %287
  %v290 = vadd.f32 %v280, %v288
  %v291 = vtanh.pop %v290
  %293 = vrot.lane.b32.xlu0 %v291, 64
  %v294 = vpop.permute.xlu0 %293
  %v296 = vmul.f32 %v278, %v294
  %298 = vrot.lane.b32.xlu0 %v296, 32
  %v299 = vpop.permute.xlu0 %298
  %301 = vst.msk [vmem:[#allocation2 + $0x8] sm:$0xff] %vm151, %v299
  %v302 = vpack.c.bf16 %v296, %v296
  %304 = vrot.lane.b32.xlu0 %v302, 32
  %v305 = vpop.permute.xlu0 %304
  %v307 = vsel %vm151, %v305, 0
  %309 = vmatprep.subr.bf16.mxu0 0
  %310 = vmatpush1.bf16.msra.mxu0 %v147
  %311 = vmatprep.subr.bf16.mxu0 0
  %312 = vmatpush1.bf16.msra.mxu0 %v148
  %313 = vmatprep.subr.bf16.mxu0 0
  %314 = vmatpush1.bf16.msra.mxu0 0
  %315 = vmatprep.subr.bf16.mxu0 0
  %316 = vmatpush1.bf16.msra.mxu0 0
  %317 = vmatprep.subr.bf16.mxu0 0
  %318 = vmatpush1.bf16.msra.mxu0 0
  %319 = vmatprep.subr.bf16.mxu0 0
  %320 = vmatpush1.bf16.msra.mxu0 0
  %321 = vmatprep.subr.bf16.mxu0 0
  %322 = vmatpush1.bf16.msra.mxu0 0
  %323 = vmatprep.subr.bf16.mxu0 0
  %324 = vmatpush1.bf16.msra.mxu0 0
  %325 = vmatprep.subr.bf16.mxu0 0
  %326 = vmatpush1.bf16.msra.mxu0 0
  %327 = vmatprep.subr.bf16.mxu0 0
  %328 = vmatpush1.bf16.msra.mxu0 0
  %329 = vmatprep.subr.bf16.mxu0 0
  %330 = vmatpush1.bf16.msra.mxu0 0
  %331 = vmatprep.subr.bf16.mxu0 0
  %332 = vmatpush1.bf16.msra.mxu0 0
  %333 = vmatprep.subr.bf16.mxu0 0
  %334 = vmatpush1.bf16.msra.mxu0 0
  %335 = vmatprep.subr.bf16.mxu0 0
  %336 = vmatpush1.bf16.msra.mxu0 0
  %337 = vmatprep.subr.bf16.mxu0 0
  %338 = vmatpush1.bf16.msra.mxu0 0
  %339 = vmatprep.subr.bf16.mxu0 0
  %340 = vmatpush1.bf16.msra.mxu0 0
  %341 = vmatprep.mubr.bf16.mxu0 0
  %342 = vmatmul.mubr.bf16.gmra.mrb[0].mxu0 %v307
  %v343 = vpop.f32.mrb[0].mxu0
  %v344 = vadd.f32 0.0, %v343
  %v345 = vpop.f32.mrb[0].mxu0
  %v346 = vpop.f32.mrb[0].mxu0
  %v347 = vpop.f32.mrb[0].mxu0
  %348 = vdwg.mxu0
  %v349 = vadd.f32 %v117, %v344
  %v350 = vxor.u32 %v349, 2147483648
  %v351 = vmul.f32 %v350, 1.442695
  %v352 = vpow.pop %v351
  %v353 = vadd.f32 %v352, 1.0
  %v354 = vrcp.pop %v353
  %v355 = vmul.f32 1.0, %v354
  %v356 = vtanh.pop %v349
  %v357 = vmul.f32 %v355, %v290
  %359 = vrot.lane.b32.xlu0 %v356, 64
  %v360 = vpop.permute.xlu0 %359
  %v362 = vmul.f32 %v355, %v360
  %364 = vrot.lane.b32.xlu0 %v362, 32
  %v365 = vpop.permute.xlu0 %364
  %v367 = vadd.f32 %v357, %v365
  %v368 = vtanh.pop %v367
  %370 = vrot.lane.b32.xlu0 %v368, 64
  %v371 = vpop.permute.xlu0 %370
  %v373 = vmul.f32 %v355, %v371
  %375 = vrot.lane.b32.xlu0 %v373, 32
  %v376 = vpop.permute.xlu0 %375
  %378 = vst.msk [vmem:[#allocation2 + $0x10] sm:$0xff] %vm151, %v376
  %v379 = vpack.c.bf16 %v373, %v373
  %381 = vrot.lane.b32.xlu0 %v379, 32
  %v382 = vpop.permute.xlu0 %381
  %v384 = vsel %vm151, %v382, 0
  %386 = vmatprep.subr.bf16.mxu0 0
  %387 = vmatpush1.bf16.msra.mxu0 %v147
  %388 = vmatprep.subr.bf16.mxu0 0
  %389 = vmatpush1.bf16.msra.mxu0 %v148
  %390 = vmatprep.subr.bf16.mxu0 0
  %391 = vmatpush1.bf16.msra.mxu0 0
  %392 = vmatprep.subr.bf16.mxu0 0
  %393 = vmatpush1.bf16.msra.mxu0 0
  %394 = vmatprep.subr.bf16.mxu0 0
  %395 = vmatpush1.bf16.msra.mxu0 0
  %396 = vmatprep.subr.bf16.mxu0 0
  %397 = vmatpush1.bf16.msra.mxu0 0
  %398 = vmatprep.subr.bf16.mxu0 0
  %399 = vmatpush1.bf16.msra.mxu0 0
  %400 = vmatprep.subr.bf16.mxu0 0
  %401 = vmatpush1.bf16.msra.mxu0 0
  %402 = vmatprep.subr.bf16.mxu0 0
  %403 = vmatpush1.bf16.msra.mxu0 0
  %404 = vmatprep.subr.bf16.mxu0 0
  %405 = vmatpush1.bf16.msra.mxu0 0
  %406 = vmatprep.subr.bf16.mxu0 0
  %407 = vmatpush1.bf16.msra.mxu0 0
  %408 = vmatprep.subr.bf16.mxu0 0
  %409 = vmatpush1.bf16.msra.mxu0 0
  %410 = vmatprep.subr.bf16.mxu0 0
  %411 = vmatpush1.bf16.msra.mxu0 0
  %412 = vmatprep.subr.bf16.mxu0 0
  %413 = vmatpush1.bf16.msra.mxu0 0
  %414 = vmatprep.subr.bf16.mxu0 0
  %415 = vmatpush1.bf16.msra.mxu0 0
  %416 = vmatprep.subr.bf16.mxu0 0
  %417 = vmatpush1.bf16.msra.mxu0 0
  %418 = vmatprep.mubr.bf16.mxu0 0
  %419 = vmatmul.mubr.bf16.gmra.mrb[0].mxu0 %v384
  %v420 = vpop.f32.mrb[0].mxu0
  %v421 = vadd.f32 0.0, %v420
  %v422 = vpop.f32.mrb[0].mxu0
  %v423 = vpop.f32.mrb[0].mxu0
  %v424 = vpop.f32.mrb[0].mxu0
  %425 = vdwg.mxu0
  %v426 = vadd.f32 %v120, %v421
  %v427 = vxor.u32 %v426, 2147483648
  %v428 = vmul.f32 %v427, 1.442695
  %v429 = vpow.pop %v428
  %v430 = vadd.f32 %v429, 1.0
  %v431 = vrcp.pop %v430
  %v432 = vmul.f32 1.0, %v431
  %v433 = vtanh.pop %v426
  %v434 = vmul.f32 %v432, %v367
  %436 = vrot.lane.b32.xlu0 %v433, 64
  %v437 = vpop.permute.xlu0 %436
  %v439 = vmul.f32 %v432, %v437
  %441 = vrot.lane.b32.xlu0 %v439, 32
  %v442 = vpop.permute.xlu0 %441
  %v444 = vadd.f32 %v434, %v442
  %v445 = vtanh.pop %v444
  %447 = vrot.lane.b32.xlu0 %v445, 64
  %v448 = vpop.permute.xlu0 %447
  %v450 = vmul.f32 %v432, %v448
  %452 = vrot.lane.b32.xlu0 %v450, 32
  %v453 = vpop.permute.xlu0 %452
  %455 = vst.msk [vmem:[#allocation2 + $0x18] sm:$0xff] %vm151, %v453
  %v456 = vpack.c.bf16 %v450, %v450
  %458 = vrot.lane.b32.xlu0 %v456, 32
  %v459 = vpop.permute.xlu0 %458
  %v461 = vsel %vm151, %v459, 0
  %463 = vmatprep.subr.bf16.mxu0 0
  %464 = vmatpush1.bf16.msra.mxu0 %v147
  %465 = vmatprep.subr.bf16.mxu0 0
  %466 = vmatpush1.bf16.msra.mxu0 %v148
  %467 = vmatprep.subr.bf16.mxu0 0
  %468 = vmatpush1.bf16.msra.mxu0 0
  %469 = vmatprep.subr.bf16.mxu0 0
  %470 = vmatpush1.bf16.msra.mxu0 0
  %471 = vmatprep.subr.bf16.mxu0 0
  %472 = vmatpush1.bf16.msra.mxu0 0
  %473 = vmatprep.subr.bf16.mxu0 0
  %474 = vmatpush1.bf16.msra.mxu0 0
  %475 = vmatprep.subr.bf16.mxu0 0
  %476 = vmatpush1.bf16.msra.mxu0 0
  %477 = vmatprep.subr.bf16.mxu0 0
  %478 = vmatpush1.bf16.msra.mxu0 0
  %479 = vmatprep.subr.bf16.mxu0 0
  %480 = vmatpush1.bf16.msra.mxu0 0
  %481 = vmatprep.subr.bf16.mxu0 0
  %482 = vmatpush1.bf16.msra.mxu0 0
  %483 = vmatprep.subr.bf16.mxu0 0
  %484 = vmatpush1.bf16.msra.mxu0 0
  %485 = vmatprep.subr.bf16.mxu0 0
  %486 = vmatpush1.bf16.msra.mxu0 0
  %487 = vmatprep.subr.bf16.mxu0 0
  %488 = vmatpush1.bf16.msra.mxu0 0
  %489 = vmatprep.subr.bf16.mxu0 0
  %490 = vmatpush1.bf16.msra.mxu0 0
  %491 = vmatprep.subr.bf16.mxu0 0
  %492 = vmatpush1.bf16.msra.mxu0 0
  %493 = vmatprep.subr.bf16.mxu0 0
  %494 = vmatpush1.bf16.msra.mxu0 0
  %495 = vmatprep.mubr.bf16.mxu0 0
  %496 = vmatmul.mubr.bf16.gmra.mrb[0].mxu0 %v461
  %v497 = vpop.f32.mrb[0].mxu0
  %v498 = vadd.f32 0.0, %v497
  %v499 = vpop.f32.mrb[0].mxu0
  %v500 = vpop.f32.mrb[0].mxu0
  %v501 = vpop.f32.mrb[0].mxu0
  %502 = vdwg.mxu0
  %v503 = vadd.f32 %v125, %v498
  %v504 = vxor.u32 %v503, 2147483648
  %v505 = vmul.f32 %v504, 1.442695
  %v506 = vpow.pop %v505
  %v507 = vadd.f32 %v506, 1.0
  %v508 = vrcp.pop %v507
  %v509 = vmul.f32 1.0, %v508
  %v510 = vtanh.pop %v503
  %v511 = vmul.f32 %v509, %v444
  %513 = vrot.lane.b32.xlu0 %v510, 64
  %v514 = vpop.permute.xlu0 %513
  %v516 = vmul.f32 %v509, %v514
  %518 = vrot.lane.b32.xlu0 %v516, 32
  %v519 = vpop.permute.xlu0 %518
  %v521 = vadd.f32 %v511, %v519
  %v522 = vtanh.pop %v521
  %524 = vrot.lane.b32.xlu0 %v522, 64
  %v525 = vpop.permute.xlu0 %524
  %v527 = vmul.f32 %v509, %v525
  %529 = vrot.lane.b32.xlu0 %v527, 32
  %v530 = vpop.permute.xlu0 %529
  %532 = vst.msk [vmem:[#allocation2 + $0x20] sm:$0xff] %vm151, %v530
  %v533 = vpack.c.bf16 %v527, %v527
  %535 = vrot.lane.b32.xlu0 %v533, 32
  %v536 = vpop.permute.xlu0 %535
  %v538 = vsel %vm151, %v536, 0
  %540 = vmatprep.subr.bf16.mxu0 0
  %541 = vmatpush1.bf16.msra.mxu0 %v147
  %542 = vmatprep.subr.bf16.mxu0 0
  %543 = vmatpush1.bf16.msra.mxu0 %v148
  %544 = vmatprep.subr.bf16.mxu0 0
  %545 = vmatpush1.bf16.msra.mxu0 0
  %546 = vmatprep.subr.bf16.mxu0 0
  %547 = vmatpush1.bf16.msra.mxu0 0
  %548 = vmatprep.subr.bf16.mxu0 0
  %549 = vmatpush1.bf16.msra.mxu0 0
  %550 = vmatprep.subr.bf16.mxu0 0
  %551 = vmatpush1.bf16.msra.mxu0 0
  %552 = vmatprep.subr.bf16.mxu0 0
  %553 = vmatpush1.bf16.msra.mxu0 0
  %554 = vmatprep.subr.bf16.mxu0 0
  %555 = vmatpush1.bf16.msra.mxu0 0
  %556 = vmatprep.subr.bf16.mxu0 0
  %557 = vmatpush1.bf16.msra.mxu0 0
  %558 = vmatprep.subr.bf16.mxu0 0
  %559 = vmatpush1.bf16.msra.mxu0 0
  %560 = vmatprep.subr.bf16.mxu0 0
  %561 = vmatpush1.bf16.msra.mxu0 0
  %562 = vmatprep.subr.bf16.mxu0 0
  %563 = vmatpush1.bf16.msra.mxu0 0
  %564 = vmatprep.subr.bf16.mxu0 0
  %565 = vmatpush1.bf16.msra.mxu0 0
  %566 = vmatprep.subr.bf16.mxu0 0
  %567 = vmatpush1.bf16.msra.mxu0 0
  %568 = vmatprep.subr.bf16.mxu0 0
  %569 = vmatpush1.bf16.msra.mxu0 0
  %570 = vmatprep.subr.bf16.mxu0 0
  %571 = vmatpush1.bf16.msra.mxu0 0
  %572 = vmatprep.mubr.bf16.mxu0 0
  %573 = vmatmul.mubr.bf16.gmra.mrb[0].mxu0 %v538
  %v574 = vpop.f32.mrb[0].mxu0
  %v575 = vadd.f32 0.0, %v574
  %v576 = vpop.f32.mrb[0].mxu0
  %v577 = vpop.f32.mrb[0].mxu0
  %v578 = vpop.f32.mrb[0].mxu0
  %579 = vdwg.mxu0
  %v580 = vadd.f32 %v128, %v575
  %v581 = vxor.u32 %v580, 2147483648
  %v582 = vmul.f32 %v581, 1.442695
  %v583 = vpow.pop %v582
  %v584 = vadd.f32 %v583, 1.0
  %v585 = vrcp.pop %v584
  %v586 = vmul.f32 1.0, %v585
  %v587 = vtanh.pop %v580
  %v588 = vmul.f32 %v586, %v521
  %590 = vrot.lane.b32.xlu0 %v587, 64
  %v591 = vpop.permute.xlu0 %590
  %v593 = vmul.f32 %v586, %v591
  %595 = vrot.lane.b32.xlu0 %v593, 32
  %v596 = vpop.permute.xlu0 %595
  %v598 = vadd.f32 %v588, %v596
  %v599 = vtanh.pop %v598
  %601 = vrot.lane.b32.xlu0 %v599, 64
  %v602 = vpop.permute.xlu0 %601
  %v604 = vmul.f32 %v586, %v602
  %606 = vrot.lane.b32.xlu0 %v604, 32
  %v607 = vpop.permute.xlu0 %606
  %609 = vst.msk [vmem:[#allocation2 + $0x28] sm:$0xff] %vm151, %v607
  %v610 = vpack.c.bf16 %v604, %v604
  %612 = vrot.lane.b32.xlu0 %v610, 32
  %v613 = vpop.permute.xlu0 %612
  %v615 = vsel %vm151, %v613, 0
  %617 = vmatprep.subr.bf16.mxu0 0
  %618 = vmatpush1.bf16.msra.mxu0 %v147
  %619 = vmatprep.subr.bf16.mxu0 0
  %620 = vmatpush1.bf16.msra.mxu0 %v148
  %621 = vmatprep.subr.bf16.mxu0 0
  %622 = vmatpush1.bf16.msra.mxu0 0
  %623 = vmatprep.subr.bf16.mxu0 0
  %624 = vmatpush1.bf16.msra.mxu0 0
  %625 = vmatprep.subr.bf16.mxu0 0
  %626 = vmatpush1.bf16.msra.mxu0 0
  %627 = vmatprep.subr.bf16.mxu0 0
  %628 = vmatpush1.bf16.msra.mxu0 0
  %629 = vmatprep.subr.bf16.mxu0 0
  %630 = vmatpush1.bf16.msra.mxu0 0
  %631 = vmatprep.subr.bf16.mxu0 0
  %632 = vmatpush1.bf16.msra.mxu0 0
  %633 = vmatprep.subr.bf16.mxu0 0
  %634 = vmatpush1.bf16.msra.mxu0 0
  %635 = vmatprep.subr.bf16.mxu0 0
  %636 = vmatpush1.bf16.msra.mxu0 0
  %637 = vmatprep.subr.bf16.mxu0 0
  %638 = vmatpush1.bf16.msra.mxu0 0
  %639 = vmatprep.subr.bf16.mxu0 0
  %640 = vmatpush1.bf16.msra.mxu0 0
  %641 = vmatprep.subr.bf16.mxu0 0
  %642 = vmatpush1.bf16.msra.mxu0 0
  %643 = vmatprep.subr.bf16.mxu0 0
  %644 = vmatpush1.bf16.msra.mxu0 0
  %645 = vmatprep.subr.bf16.mxu0 0
  %646 = vmatpush1.bf16.msra.mxu0 0
  %647 = vmatprep.subr.bf16.mxu0 0
  %648 = vmatpush1.bf16.msra.mxu0 0
  %649 = vmatprep.mubr.bf16.mxu0 0
  %650 = vmatmul.mubr.bf16.gmra.mrb[0].mxu0 %v615
  %v651 = vpop.f32.mrb[0].mxu0
  %v652 = vadd.f32 0.0, %v651
  %v653 = vpop.f32.mrb[0].mxu0
  %v654 = vpop.f32.mrb[0].mxu0
  %v655 = vpop.f32.mrb[0].mxu0
  %656 = vdwg.mxu0
  %v657 = vadd.f32 %v133, %v652
  %v658 = vxor.u32 %v657, 2147483648
  %v659 = vmul.f32 %v658, 1.442695
  %v660 = vpow.pop %v659
  %v661 = vadd.f32 %v660, 1.0
  %v662 = vrcp.pop %v661
  %v663 = vmul.f32 1.0, %v662
  %v664 = vtanh.pop %v657
  %v665 = vmul.f32 %v663, %v598
  %667 = vrot.lane.b32.xlu0 %v664, 64
  %v668 = vpop.permute.xlu0 %667
  %v670 = vmul.f32 %v663, %v668
  %672 = vrot.lane.b32.xlu0 %v670, 32
  %v673 = vpop.permute.xlu0 %672
  %v675 = vadd.f32 %v665, %v673
  %v676 = vtanh.pop %v675
  %678 = vrot.lane.b32.xlu0 %v676, 64
  %v679 = vpop.permute.xlu0 %678
  %v681 = vmul.f32 %v663, %v679
  %683 = vrot.lane.b32.xlu0 %v681, 32
  %v684 = vpop.permute.xlu0 %683
  %686 = vst.msk [vmem:[#allocation2 + $0x30] sm:$0xff] %vm151, %v684
  %v687 = vpack.c.bf16 %v681, %v681
  %689 = vrot.lane.b32.xlu0 %v687, 32
  %v690 = vpop.permute.xlu0 %689
  %v692 = vsel %vm151, %v690, 0
  %694 = vmatprep.subr.bf16.mxu0 0
  %695 = vmatpush1.bf16.msra.mxu0 %v147
  %696 = vmatprep.subr.bf16.mxu0 0
  %697 = vmatpush1.bf16.msra.mxu0 %v148
  %698 = vmatprep.subr.bf16.mxu0 0
  %699 = vmatpush1.bf16.msra.mxu0 0
  %700 = vmatprep.subr.bf16.mxu0 0
  %701 = vmatpush1.bf16.msra.mxu0 0
  %702 = vmatprep.subr.bf16.mxu0 0
  %703 = vmatpush1.bf16.msra.mxu0 0
  %704 = vmatprep.subr.bf16.mxu0 0
  %705 = vmatpush1.bf16.msra.mxu0 0
  %706 = vmatprep.subr.bf16.mxu0 0
  %707 = vmatpush1.bf16.msra.mxu0 0
  %708 = vmatprep.subr.bf16.mxu0 0
  %709 = vmatpush1.bf16.msra.mxu0 0
  %710 = vmatprep.subr.bf16.mxu0 0
  %711 = vmatpush1.bf16.msra.mxu0 0
  %712 = vmatprep.subr.bf16.mxu0 0
  %713 = vmatpush1.bf16.msra.mxu0 0
  %714 = vmatprep.subr.bf16.mxu0 0
  %715 = vmatpush1.bf16.msra.mxu0 0
  %716 = vmatprep.subr.bf16.mxu0 0
  %717 = vmatpush1.bf16.msra.mxu0 0
  %718 = vmatprep.subr.bf16.mxu0 0
  %719 = vmatpush1.bf16.msra.mxu0 0
  %720 = vmatprep.subr.bf16.mxu0 0
  %721 = vmatpush1.bf16.msra.mxu0 0
  %722 = vmatprep.subr.bf16.mxu0 0
  %723 = vmatpush1.bf16.msra.mxu0 0
  %724 = vmatprep.subr.bf16.mxu0 0
  %725 = vmatpush1.bf16.msra.mxu0 0
  %726 = vmatprep.mubr.bf16.mxu0 0
  %727 = vmatmul.mubr.bf16.gmra.mrb[0].mxu0 %v692
  %v728 = vpop.f32.mrb[0].mxu0
  %v729 = vadd.f32 0.0, %v728
  %v730 = vpop.f32.mrb[0].mxu0
  %v731 = vpop.f32.mrb[0].mxu0
  %v732 = vpop.f32.mrb[0].mxu0
  %733 = vdwg.mxu0
  %v734 = vadd.f32 %v136, %v729
  %v735 = vxor.u32 %v734, 2147483648
  %v736 = vmul.f32 %v735, 1.442695
  %v737 = vpow.pop %v736
  %v738 = vadd.f32 %v737, 1.0
  %v739 = vrcp.pop %v738
  %v740 = vmul.f32 1.0, %v739
  %v741 = vtanh.pop %v734
  %v742 = vmul.f32 %v740, %v675
  %744 = vrot.lane.b32.xlu0 %v741, 64
  %v745 = vpop.permute.xlu0 %744
  %v747 = vmul.f32 %v740, %v745
  %749 = vrot.lane.b32.xlu0 %v747, 32
  %v750 = vpop.permute.xlu0 %749
  %v752 = vadd.f32 %v742, %v750
  %v753 = vtanh.pop %v752
  %755 = vrot.lane.b32.xlu0 %v753, 64
  %v756 = vpop.permute.xlu0 %755
  %v758 = vmul.f32 %v740, %v756
  %760 = vrot.lane.b32.xlu0 %v758, 32
  %v761 = vpop.permute.xlu0 %760
  %763 = vst.msk [vmem:[#allocation2 + $0x38] sm:$0xff] %vm151, %v761
  %v764 = vld [vmem:[%s4] sm:$0xf]
  %v765 = vld [vmem:[%s4 + $0x4] sm:$0xf]
  %v766 = vld [vmem:[%s4 + $0x8] sm:$0xf]
  %v767 = vld [vmem:[%s4 + $0xc] sm:$0xf]
  %v768 = vld [vmem:[%s5] sm:$0xf]
  %v769 = vld [vmem:[%s5 + $0x4] sm:$0xf]
  %v770 = vld [vmem:[%s5 + $0x8] sm:$0xf]
  %v771 = vld [vmem:[%s5 + $0xc] sm:$0xf]
  %v772 = vld [vmem:[%s6] sm:$0x1]
  %v773 = vld [vmem:[#allocation2] sm:$0xff]
  %v774 = vld [vmem:[#allocation2 + $0x8] sm:$0xff]
  %v775 = vld [vmem:[#allocation2 + $0x10] sm:$0xff]
  %v776 = vld [vmem:[#allocation2 + $0x18] sm:$0xff]
  %v777 = vld [vmem:[#allocation2 + $0x20] sm:$0xff]
  %v778 = vld [vmem:[#allocation2 + $0x28] sm:$0xff]
  %v779 = vld [vmem:[#allocation2 + $0x30] sm:$0xff]
  %v780 = vld [vmem:[#allocation2 + $0x38] sm:$0xff]
  %v781 = vpack.c.bf16 %v774, %v773
  %v782 = vpack.c.bf16 %v776, %v775
  %v783 = vpack.c.bf16 %v778, %v777
  %v784 = vpack.c.bf16 %v780, %v779
  %v786 = vlaneseq
  %v787 = vshrl.u32 %v786, 7
  %v788 = vsub.s32 0, %v787
  %v789 = vrot.slane %v772, %v788
  %v795 = vunpack.c.l.b16 %v764
  %v796 = vunpack.c.l.b16 %v765
  %v797 = vunpack.c.l.b16 %v766
  %v798 = vunpack.c.l.b16 %v767
  %v799 = vpack.c.b16 %v796, %v795
  %v800 = vpack.c.b16 %v798, %v797
  %v804 = vsel %vm151, %v781, 0
  %v807 = vsel %vm151, %v782, 0
  %v810 = vsel %vm151, %v783, 0
  %v813 = vsel %vm151, %v784, 0
  %815 = vmatprep.subr.bf16.mxu0 0
  %816 = vmatpush1.bf16.msra.mxu0 %v799
  %817 = vmatprep.subr.bf16.mxu0 0
  %818 = vmatpush1.bf16.msra.mxu0 %v800
  %819 = vmatprep.subr.bf16.mxu0 0
  %820 = vmatpush1.bf16.msra.mxu0 0
  %821 = vmatprep.subr.bf16.mxu0 0
  %822 = vmatpush1.bf16.msra.mxu0 0
  %823 = vmatprep.subr.bf16.mxu0 0
  %824 = vmatpush1.bf16.msra.mxu0 0
  %825 = vmatprep.subr.bf16.mxu0 0
  %826 = vmatpush1.bf16.msra.mxu0 0
  %827 = vmatprep.subr.bf16.mxu0 0
  %828 = vmatpush1.bf16.msra.mxu0 0
  %829 = vmatprep.subr.bf16.mxu0 0
  %830 = vmatpush1.bf16.msra.mxu0 0
  %831 = vmatprep.subr.bf16.mxu0 0
  %832 = vmatpush1.bf16.msra.mxu0 0
  %833 = vmatprep.subr.bf16.mxu0 0
  %834 = vmatpush1.bf16.msra.mxu0 0
  %835 = vmatprep.subr.bf16.mxu0 0
  %836 = vmatpush1.bf16.msra.mxu0 0
  %837 = vmatprep.subr.bf16.mxu0 0
  %838 = vmatpush1.bf16.msra.mxu0 0
  %839 = vmatprep.subr.bf16.mxu0 0
  %840 = vmatpush1.bf16.msra.mxu0 0
  %841 = vmatprep.subr.bf16.mxu0 0
  %842 = vmatpush1.bf16.msra.mxu0 0
  %843 = vmatprep.subr.bf16.mxu0 0
  %844 = vmatpush1.bf16.msra.mxu0 0
  %845 = vmatprep.subr.bf16.mxu0 0
  %846 = vmatpush1.bf16.msra.mxu0 0
  %847 = vmatprep.mubr.bf16.mxu0 0
  %848 = vmatmul.mubr.bf16.gmra.mrb[0].mxu0 %v804
  %v849 = vpop.f32.mrb[0].mxu0
  %v850 = vadd.f32 %v789, %v849
  %v851 = vpop.f32.mrb[0].mxu0
  %v852 = vpop.f32.mrb[0].mxu0
  %v853 = vadd.f32 %v789, %v852
  %v854 = vpop.f32.mrb[0].mxu0
  %855 = vmatprep.mubr.bf16.mxu0 0
  %856 = vmatmul.mubr.bf16.gmra.mrb[0].mxu0 %v807
  %v857 = vpop.f32.mrb[0].mxu0
  %v858 = vadd.f32 %v789, %v857
  %v859 = vpop.f32.mrb[0].mxu0
  %v860 = vpop.f32.mrb[0].mxu0
  %v861 = vadd.f32 %v789, %v860
  %v862 = vpop.f32.mrb[0].mxu0
  %863 = vmatprep.mubr.bf16.mxu0 0
  %864 = vmatmul.mubr.bf16.gmra.mrb[0].mxu0 %v810
  %v865 = vpop.f32.mrb[0].mxu0
  %v866 = vadd.f32 %v789, %v865
  %v867 = vpop.f32.mrb[0].mxu0
  %v868 = vpop.f32.mrb[0].mxu0
  %v869 = vadd.f32 %v789, %v868
  %v870 = vpop.f32.mrb[0].mxu0
  %871 = vmatprep.mubr.bf16.mxu0 0
  %872 = vmatmul.mubr.bf16.gmra.mrb[0].mxu0 %v813
  %v873 = vpop.f32.mrb[0].mxu0
  %v874 = vadd.f32 %v789, %v873
  %v875 = vpop.f32.mrb[0].mxu0
  %v876 = vpop.f32.mrb[0].mxu0
  %v877 = vadd.f32 %v789, %v876
  %v878 = vpop.f32.mrb[0].mxu0
  %879 = vdwg.mxu0
  %v884 = vunpack.c.l.b16 %v768
  %v885 = vunpack.c.l.b16 %v769
  %v886 = vunpack.c.l.b16 %v770
  %v887 = vunpack.c.l.b16 %v771
  %v888 = vpack.c.b16 %v885, %v884
  %v889 = vpack.c.b16 %v887, %v886
  %892 = vmatprep.subr.bf16.mxu0 0
  %893 = vmatpush1.bf16.msra.mxu0 %v888
  %894 = vmatprep.subr.bf16.mxu0 0
  %895 = vmatpush1.bf16.msra.mxu0 %v889
  %896 = vmatprep.subr.bf16.mxu0 0
  %897 = vmatpush1.bf16.msra.mxu0 0
  %898 = vmatprep.subr.bf16.mxu0 0
  %899 = vmatpush1.bf16.msra.mxu0 0
  %900 = vmatprep.subr.bf16.mxu0 0
  %901 = vmatpush1.bf16.msra.mxu0 0
  %902 = vmatprep.subr.bf16.mxu0 0
  %903 = vmatpush1.bf16.msra.mxu0 0
  %904 = vmatprep.subr.bf16.mxu0 0
  %905 = vmatpush1.bf16.msra.mxu0 0
  %906 = vmatprep.subr.bf16.mxu0 0
  %907 = vmatpush1.bf16.msra.mxu0 0
  %908 = vmatprep.subr.bf16.mxu0 0
  %909 = vmatpush1.bf16.msra.mxu0 0
  %910 = vmatprep.subr.bf16.mxu0 0
  %911 = vmatpush1.bf16.msra.mxu0 0
  %912 = vmatprep.subr.bf16.mxu0 0
  %913 = vmatpush1.bf16.msra.mxu0 0
  %914 = vmatprep.subr.bf16.mxu0 0
  %915 = vmatpush1.bf16.msra.mxu0 0
  %916 = vmatprep.subr.bf16.mxu0 0
  %917 = vmatpush1.bf16.msra.mxu0 0
  %918 = vmatprep.subr.bf16.mxu0 0
  %919 = vmatpush1.bf16.msra.mxu0 0
  %920 = vmatprep.subr.bf16.mxu0 0
  %921 = vmatpush1.bf16.msra.mxu0 0
  %922 = vmatprep.subr.bf16.mxu0 0
  %923 = vmatpush1.bf16.msra.mxu0 0
  %924 = vmatprep.mubr.bf16.mxu0 0
  %925 = vmatmul.mubr.bf16.gmra.mrb[0].mxu0 %v153
  %v926 = vpop.f32.mrb[0].mxu0
  %v927 = vadd.f32 0.0, %v926
  %v928 = vpop.f32.mrb[0].mxu0
  %v929 = vpop.f32.mrb[0].mxu0
  %v930 = vpop.f32.mrb[0].mxu0
  %931 = vdwg.mxu0
  %v932 = vadd.f32 %v850, %v927
  %v933 = vxor.u32 %v932, 2147483648
  %v934 = vmul.f32 %v933, 1.442695
  %v935 = vpow.pop %v934
  %v936 = vadd.f32 %v935, 1.0
  %v937 = vrcp.pop %v936
  %v938 = vmul.f32 1.0, %v937
  %v939 = vtanh.pop %v932
  %v940 = vmul.f32 %v938, 0.0
  %942 = vrot.lane.b32.xlu0 %v939, 64
  %v943 = vpop.permute.xlu0 %942
  %v945 = vmul.f32 %v938, %v943
  %947 = vrot.lane.b32.xlu0 %v945, 32
  %v948 = vpop.permute.xlu0 %947
  %v950 = vadd.f32 %v940, %v948
  %v951 = vtanh.pop %v950
  %953 = vrot.lane.b32.xlu0 %v951, 64
  %v954 = vpop.permute.xlu0 %953
  %v956 = vmul.f32 %v938, %v954
  %v957 = vpack.c.bf16 %v956, %v956
  %959 = vrot.lane.b32.xlu0 %v957, 32
  %v960 = vpop.permute.xlu0 %959
  %v962 = vsel %vm151, %v960, 0
  %964 = vmatprep.subr.bf16.mxu0 0
  %965 = vmatpush1.bf16.msra.mxu0 %v888
  %966 = vmatprep.subr.bf16.mxu0 0
  %967 = vmatpush1.bf16.msra.mxu0 %v889
  %968 = vmatprep.subr.bf16.mxu0 0
  %969 = vmatpush1.bf16.msra.mxu0 0
  %970 = vmatprep.subr.bf16.mxu0 0
  %971 = vmatpush1.bf16.msra.mxu0 0
  %972 = vmatprep.subr.bf16.mxu0 0
  %973 = vmatpush1.bf16.msra.mxu0 0
  %974 = vmatprep.subr.bf16.mxu0 0
  %975 = vmatpush1.bf16.msra.mxu0 0
  %976 = vmatprep.subr.bf16.mxu0 0
  %977 = vmatpush1.bf16.msra.mxu0 0
  %978 = vmatprep.subr.bf16.mxu0 0
  %979 = vmatpush1.bf16.msra.mxu0 0
  %980 = vmatprep.subr.bf16.mxu0 0
  %981 = vmatpush1.bf16.msra.mxu0 0
  %982 = vmatprep.subr.bf16.mxu0 0
  %983 = vmatpush1.bf16.msra.mxu0 0
  %984 = vmatprep.subr.bf16.mxu0 0
  %985 = vmatpush1.bf16.msra.mxu0 0
  %986 = vmatprep.subr.bf16.mxu0 0
  %987 = vmatpush1.bf16.msra.mxu0 0
  %988 = vmatprep.subr.bf16.mxu0 0
  %989 = vmatpush1.bf16.msra.mxu0 0
  %990 = vmatprep.subr.bf16.mxu0 0
  %991 = vmatpush1.bf16.msra.mxu0 0
  %992 = vmatprep.subr.bf16.mxu0 0
  %993 = vmatpush1.bf16.msra.mxu0 0
  %994 = vmatprep.subr.bf16.mxu0 0
  %995 = vmatpush1.bf16.msra.mxu0 0
  %996 = vmatprep.mubr.bf16.mxu0 0
  %997 = vmatmul.mubr.bf16.gmra.mrb[0].mxu0 %v962
  %v998 = vpop.f32.mrb[0].mxu0
  %v999 = vadd.f32 0.0, %v998
  %v1000 = vpop.f32.mrb[0].mxu0
  %v1001 = vpop.f32.mrb[0].mxu0
  %v1002 = vpop.f32.mrb[0].mxu0
  %1003 = vdwg.mxu0
  %v1004 = vadd.f32 %v853, %v999
  %v1005 = vxor.u32 %v1004, 2147483648
  %v1006 = vmul.f32 %v1005, 1.442695
  %v1007 = vpow.pop %v1006
  %v1008 = vadd.f32 %v1007, 1.0
  %v1009 = vrcp.pop %v1008
  %v1010 = vmul.f32 1.0, %v1009
  %v1011 = vtanh.pop %v1004
  %v1012 = vmul.f32 %v1010, %v950
  %1014 = vrot.lane.b32.xlu0 %v1011, 64
  %v1015 = vpop.permute.xlu0 %1014
  %v1017 = vmul.f32 %v1010, %v1015
  %1019 = vrot.lane.b32.xlu0 %v1017, 32
  %v1020 = vpop.permute.xlu0 %1019
  %v1022 = vadd.f32 %v1012, %v1020
  %v1023 = vtanh.pop %v1022
  %1025 = vrot.lane.b32.xlu0 %v1023, 64
  %v1026 = vpop.permute.xlu0 %1025
  %v1028 = vmul.f32 %v1010, %v1026
  %v1029 = vpack.c.bf16 %v1028, %v1028
  %1031 = vrot.lane.b32.xlu0 %v1029, 32
  %v1032 = vpop.permute.xlu0 %1031
  %v1034 = vsel %vm151, %v1032, 0
  %1036 = vmatprep.subr.bf16.mxu0 0
  %1037 = vmatpush1.bf16.msra.mxu0 %v888
  %1038 = vmatprep.subr.bf16.mxu0 0
  %1039 = vmatpush1.bf16.msra.mxu0 %v889
  %1040 = vmatprep.subr.bf16.mxu0 0
  %1041 = vmatpush1.bf16.msra.mxu0 0
  %1042 = vmatprep.subr.bf16.mxu0 0
  %1043 = vmatpush1.bf16.msra.mxu0 0
  %1044 = vmatprep.subr.bf16.mxu0 0
  %1045 = vmatpush1.bf16.msra.mxu0 0
  %1046 = vmatprep.subr.bf16.mxu0 0
  %1047 = vmatpush1.bf16.msra.mxu0 0
  %1048 = vmatprep.subr.bf16.mxu0 0
  %1049 = vmatpush1.bf16.msra.mxu0 0
  %1050 = vmatprep.subr.bf16.mxu0 0
  %1051 = vmatpush1.bf16.msra.mxu0 0
  %1052 = vmatprep.subr.bf16.mxu0 0
  %1053 = vmatpush1.bf16.msra.mxu0 0
  %1054 = vmatprep.subr.bf16.mxu0 0
  %1055 = vmatpush1.bf16.msra.mxu0 0
  %1056 = vmatprep.subr.bf16.mxu0 0
  %1057 = vmatpush1.bf16.msra.mxu0 0
  %1058 = vmatprep.subr.bf16.mxu0 0
  %1059 = vmatpush1.bf16.msra.mxu0 0
  %1060 = vmatprep.subr.bf16.mxu0 0
  %1061 = vmatpush1.bf16.msra.mxu0 0
  %1062 = vmatprep.subr.bf16.mxu0 0
  %1063 = vmatpush1.bf16.msra.mxu0 0
  %1064 = vmatprep.subr.bf16.mxu0 0
  %1065 = vmatpush1.bf16.msra.mxu0 0
  %1066 = vmatprep.subr.bf16.mxu0 0
  %1067 = vmatpush1.bf16.msra.mxu0 0
  %1068 = vmatprep.mubr.bf16.mxu0 0
  %1069 = vmatmul.mubr.bf16.gmra.mrb[0].mxu0 %v1034
  %v1070 = vpop.f32.mrb[0].mxu0
  %v1071 = vadd.f32 0.0, %v1070
  %v1072 = vpop.f32.mrb[0].mxu0
  %v1073 = vpop.f32.mrb[0].mxu0
  %v1074 = vpop.f32.mrb[0].mxu0
  %1075 = vdwg.mxu0
  %v1076 = vadd.f32 %v858, %v1071
  %v1077 = vxor.u32 %v1076, 2147483648
  %v1078 = vmul.f32 %v1077, 1.442695
  %v1079 = vpow.pop %v1078
  %v1080 = vadd.f32 %v1079, 1.0
  %v1081 = vrcp.pop %v1080
  %v1082 = vmul.f32 1.0, %v1081
  %v1083 = vtanh.pop %v1076
  %v1084 = vmul.f32 %v1082, %v1022
  %1086 = vrot.lane.b32.xlu0 %v1083, 64
  %v1087 = vpop.permute.xlu0 %1086
  %v1089 = vmul.f32 %v1082, %v1087
  %1091 = vrot.lane.b32.xlu0 %v1089, 32
  %v1092 = vpop.permute.xlu0 %1091
  %v1094 = vadd.f32 %v1084, %v1092
  %v1095 = vtanh.pop %v1094
  %1097 = vrot.lane.b32.xlu0 %v1095, 64
  %v1098 = vpop.permute.xlu0 %1097
  %v1100 = vmul.f32 %v1082, %v1098
  %v1101 = vpack.c.bf16 %v1100, %v1100
  %1103 = vrot.lane.b32.xlu0 %v1101, 32
  %v1104 = vpop.permute.xlu0 %1103
  %v1106 = vsel %vm151, %v1104, 0
  %1108 = vmatprep.subr.bf16.mxu0 0
  %1109 = vmatpush1.bf16.msra.mxu0 %v888
  %1110 = vmatprep.subr.bf16.mxu0 0
  %1111 = vmatpush1.bf16.msra.mxu0 %v889
  %1112 = vmatprep.subr.bf16.mxu0 0
  %1113 = vmatpush1.bf16.msra.mxu0 0
  %1114 = vmatprep.subr.bf16.mxu0 0
  %1115 = vmatpush1.bf16.msra.mxu0 0
  %1116 = vmatprep.subr.bf16.mxu0 0
  %1117 = vmatpush1.bf16.msra.mxu0 0
  %1118 = vmatprep.subr.bf16.mxu0 0
  %1119 = vmatpush1.bf16.msra.mxu0 0
  %1120 = vmatprep.subr.bf16.mxu0 0
  %1121 = vmatpush1.bf16.msra.mxu0 0
  %1122 = vmatprep.subr.bf16.mxu0 0
  %1123 = vmatpush1.bf16.msra.mxu0 0
  %1124 = vmatprep.subr.bf16.mxu0 0
  %1125 = vmatpush1.bf16.msra.mxu0 0
  %1126 = vmatprep.subr.bf16.mxu0 0
  %1127 = vmatpush1.bf16.msra.mxu0 0
  %1128 = vmatprep.subr.bf16.mxu0 0
  %1129 = vmatpush1.bf16.msra.mxu0 0
  %1130 = vmatprep.subr.bf16.mxu0 0
  %1131 = vmatpush1.bf16.msra.mxu0 0
  %1132 = vmatprep.subr.bf16.mxu0 0
  %1133 = vmatpush1.bf16.msra.mxu0 0
  %1134 = vmatprep.subr.bf16.mxu0 0
  %1135 = vmatpush1.bf16.msra.mxu0 0
  %1136 = vmatprep.subr.bf16.mxu0 0
  %1137 = vmatpush1.bf16.msra.mxu0 0
  %1138 = vmatprep.subr.bf16.mxu0 0
  %1139 = vmatpush1.bf16.msra.mxu0 0
  %1140 = vmatprep.mubr.bf16.mxu0 0
  %1141 = vmatmul.mubr.bf16.gmra.mrb[0].mxu0 %v1106
  %v1142 = vpop.f32.mrb[0].mxu0
  %v1143 = vadd.f32 0.0, %v1142
  %v1144 = vpop.f32.mrb[0].mxu0
  %v1145 = vpop.f32.mrb[0].mxu0
  %v1146 = vpop.f32.mrb[0].mxu0
  %1147 = vdwg.mxu0
  %v1148 = vadd.f32 %v861, %v1143
  %v1149 = vxor.u32 %v1148, 2147483648
  %v1150 = vmul.f32 %v1149, 1.442695
  %v1151 = vpow.pop %v1150
  %v1152 = vadd.f32 %v1151, 1.0
  %v1153 = vrcp.pop %v1152
  %v1154 = vmul.f32 1.0, %v1153
  %v1155 = vtanh.pop %v1148
  %v1156 = vmul.f32 %v1154, %v1094
  %1158 = vrot.lane.b32.xlu0 %v1155, 64
  %v1159 = vpop.permute.xlu0 %1158
  %v1161 = vmul.f32 %v1154, %v1159
  %1163 = vrot.lane.b32.xlu0 %v1161, 32
  %v1164 = vpop.permute.xlu0 %1163
  %v1166 = vadd.f32 %v1156, %v1164
  %v1167 = vtanh.pop %v1166
  %1169 = vrot.lane.b32.xlu0 %v1167, 64
  %v1170 = vpop.permute.xlu0 %1169
  %v1172 = vmul.f32 %v1154, %v1170
  %v1173 = vpack.c.bf16 %v1172, %v1172
  %1175 = vrot.lane.b32.xlu0 %v1173, 32
  %v1176 = vpop.permute.xlu0 %1175
  %v1178 = vsel %vm151, %v1176, 0
  %1180 = vmatprep.subr.bf16.mxu0 0
  %1181 = vmatpush1.bf16.msra.mxu0 %v888
  %1182 = vmatprep.subr.bf16.mxu0 0
  %1183 = vmatpush1.bf16.msra.mxu0 %v889
  %1184 = vmatprep.subr.bf16.mxu0 0
  %1185 = vmatpush1.bf16.msra.mxu0 0
  %1186 = vmatprep.subr.bf16.mxu0 0
  %1187 = vmatpush1.bf16.msra.mxu0 0
  %1188 = vmatprep.subr.bf16.mxu0 0
  %1189 = vmatpush1.bf16.msra.mxu0 0
  %1190 = vmatprep.subr.bf16.mxu0 0
  %1191 = vmatpush1.bf16.msra.mxu0 0
  %1192 = vmatprep.subr.bf16.mxu0 0
  %1193 = vmatpush1.bf16.msra.mxu0 0
  %1194 = vmatprep.subr.bf16.mxu0 0
  %1195 = vmatpush1.bf16.msra.mxu0 0
  %1196 = vmatprep.subr.bf16.mxu0 0
  %1197 = vmatpush1.bf16.msra.mxu0 0
  %1198 = vmatprep.subr.bf16.mxu0 0
  %1199 = vmatpush1.bf16.msra.mxu0 0
  %1200 = vmatprep.subr.bf16.mxu0 0
  %1201 = vmatpush1.bf16.msra.mxu0 0
  %1202 = vmatprep.subr.bf16.mxu0 0
  %1203 = vmatpush1.bf16.msra.mxu0 0
  %1204 = vmatprep.subr.bf16.mxu0 0
  %1205 = vmatpush1.bf16.msra.mxu0 0
  %1206 = vmatprep.subr.bf16.mxu0 0
  %1207 = vmatpush1.bf16.msra.mxu0 0
  %1208 = vmatprep.subr.bf16.mxu0 0
  %1209 = vmatpush1.bf16.msra.mxu0 0
  %1210 = vmatprep.subr.bf16.mxu0 0
  %1211 = vmatpush1.bf16.msra.mxu0 0
  %1212 = vmatprep.mubr.bf16.mxu0 0
  %1213 = vmatmul.mubr.bf16.gmra.mrb[0].mxu0 %v1178
  %v1214 = vpop.f32.mrb[0].mxu0
  %v1215 = vadd.f32 0.0, %v1214
  %v1216 = vpop.f32.mrb[0].mxu0
  %v1217 = vpop.f32.mrb[0].mxu0
  %v1218 = vpop.f32.mrb[0].mxu0
  %1219 = vdwg.mxu0
  %v1220 = vadd.f32 %v866, %v1215
  %v1221 = vxor.u32 %v1220, 2147483648
  %v1222 = vmul.f32 %v1221, 1.442695
  %v1223 = vpow.pop %v1222
  %v1224 = vadd.f32 %v1223, 1.0
  %v1225 = vrcp.pop %v1224
  %v1226 = vmul.f32 1.0, %v1225
  %v1227 = vtanh.pop %v1220
  %v1228 = vmul.f32 %v1226, %v1166
  %1230 = vrot.lane.b32.xlu0 %v1227, 64
  %v1231 = vpop.permute.xlu0 %1230
  %v1233 = vmul.f32 %v1226, %v1231
  %1235 = vrot.lane.b32.xlu0 %v1233, 32
  %v1236 = vpop.permute.xlu0 %1235
  %v1238 = vadd.f32 %v1228, %v1236
  %v1239 = vtanh.pop %v1238
  %1241 = vrot.lane.b32.xlu0 %v1239, 64
  %v1242 = vpop.permute.xlu0 %1241
  %v1244 = vmul.f32 %v1226, %v1242
  %v1245 = vpack.c.bf16 %v1244, %v1244
  %1247 = vrot.lane.b32.xlu0 %v1245, 32
  %v1248 = vpop.permute.xlu0 %1247
  %v1250 = vsel %vm151, %v1248, 0
  %1252 = vmatprep.subr.bf16.mxu0 0
  %1253 = vmatpush1.bf16.msra.mxu0 %v888
  %1254 = vmatprep.subr.bf16.mxu0 0
  %1255 = vmatpush1.bf16.msra.mxu0 %v889
  %1256 = vmatprep.subr.bf16.mxu0 0
  %1257 = vmatpush1.bf16.msra.mxu0 0
  %1258 = vmatprep.subr.bf16.mxu0 0
  %1259 = vmatpush1.bf16.msra.mxu0 0
  %1260 = vmatprep.subr.bf16.mxu0 0
  %1261 = vmatpush1.bf16.msra.mxu0 0
  %1262 = vmatprep.subr.bf16.mxu0 0
  %1263 = vmatpush1.bf16.msra.mxu0 0
  %1264 = vmatprep.subr.bf16.mxu0 0
  %1265 = vmatpush1.bf16.msra.mxu0 0
  %1266 = vmatprep.subr.bf16.mxu0 0
  %1267 = vmatpush1.bf16.msra.mxu0 0
  %1268 = vmatprep.subr.bf16.mxu0 0
  %1269 = vmatpush1.bf16.msra.mxu0 0
  %1270 = vmatprep.subr.bf16.mxu0 0
  %1271 = vmatpush1.bf16.msra.mxu0 0
  %1272 = vmatprep.subr.bf16.mxu0 0
  %1273 = vmatpush1.bf16.msra.mxu0 0
  %1274 = vmatprep.subr.bf16.mxu0 0
  %1275 = vmatpush1.bf16.msra.mxu0 0
  %1276 = vmatprep.subr.bf16.mxu0 0
  %1277 = vmatpush1.bf16.msra.mxu0 0
  %1278 = vmatprep.subr.bf16.mxu0 0
  %1279 = vmatpush1.bf16.msra.mxu0 0
  %1280 = vmatprep.subr.bf16.mxu0 0
  %1281 = vmatpush1.bf16.msra.mxu0 0
  %1282 = vmatprep.subr.bf16.mxu0 0
  %1283 = vmatpush1.bf16.msra.mxu0 0
  %1284 = vmatprep.mubr.bf16.mxu0 0
  %1285 = vmatmul.mubr.bf16.gmra.mrb[0].mxu0 %v1250
  %v1286 = vpop.f32.mrb[0].mxu0
  %v1287 = vadd.f32 0.0, %v1286
  %v1288 = vpop.f32.mrb[0].mxu0
  %v1289 = vpop.f32.mrb[0].mxu0
  %v1290 = vpop.f32.mrb[0].mxu0
  %1291 = vdwg.mxu0
  %v1292 = vadd.f32 %v869, %v1287
  %v1293 = vxor.u32 %v1292, 2147483648
  %v1294 = vmul.f32 %v1293, 1.442695
  %v1295 = vpow.pop %v1294
  %v1296 = vadd.f32 %v1295, 1.0
  %v1297 = vrcp.pop %v1296
  %v1298 = vmul.f32 1.0, %v1297
  %v1299 = vtanh.pop %v1292
  %v1300 = vmul.f32 %v1298, %v1238
  %1302 = vrot.lane.b32.xlu0 %v1299, 64
  %v1303 = vpop.permute.xlu0 %1302
  %v1305 = vmul.f32 %v1298, %v1303
  %1307 = vrot.lane.b32.xlu0 %v1305, 32
  %v1308 = vpop.permute.xlu0 %1307
  %v1310 = vadd.f32 %v1300, %v1308
  %v1311 = vtanh.pop %v1310
  %1313 = vrot.lane.b32.xlu0 %v1311, 64
  %v1314 = vpop.permute.xlu0 %1313
  %v1316 = vmul.f32 %v1298, %v1314
  %v1317 = vpack.c.bf16 %v1316, %v1316
  %1319 = vrot.lane.b32.xlu0 %v1317, 32
  %v1320 = vpop.permute.xlu0 %1319
  %v1322 = vsel %vm151, %v1320, 0
  %1324 = vmatprep.subr.bf16.mxu0 0
  %1325 = vmatpush1.bf16.msra.mxu0 %v888
  %1326 = vmatprep.subr.bf16.mxu0 0
  %1327 = vmatpush1.bf16.msra.mxu0 %v889
  %1328 = vmatprep.subr.bf16.mxu0 0
  %1329 = vmatpush1.bf16.msra.mxu0 0
  %1330 = vmatprep.subr.bf16.mxu0 0
  %1331 = vmatpush1.bf16.msra.mxu0 0
  %1332 = vmatprep.subr.bf16.mxu0 0
  %1333 = vmatpush1.bf16.msra.mxu0 0
  %1334 = vmatprep.subr.bf16.mxu0 0
  %1335 = vmatpush1.bf16.msra.mxu0 0
  %1336 = vmatprep.subr.bf16.mxu0 0
  %1337 = vmatpush1.bf16.msra.mxu0 0
  %1338 = vmatprep.subr.bf16.mxu0 0
  %1339 = vmatpush1.bf16.msra.mxu0 0
  %1340 = vmatprep.subr.bf16.mxu0 0
  %1341 = vmatpush1.bf16.msra.mxu0 0
  %1342 = vmatprep.subr.bf16.mxu0 0
  %1343 = vmatpush1.bf16.msra.mxu0 0
  %1344 = vmatprep.subr.bf16.mxu0 0
  %1345 = vmatpush1.bf16.msra.mxu0 0
  %1346 = vmatprep.subr.bf16.mxu0 0
  %1347 = vmatpush1.bf16.msra.mxu0 0
  %1348 = vmatprep.subr.bf16.mxu0 0
  %1349 = vmatpush1.bf16.msra.mxu0 0
  %1350 = vmatprep.subr.bf16.mxu0 0
  %1351 = vmatpush1.bf16.msra.mxu0 0
  %1352 = vmatprep.subr.bf16.mxu0 0
  %1353 = vmatpush1.bf16.msra.mxu0 0
  %1354 = vmatprep.subr.bf16.mxu0 0
  %1355 = vmatpush1.bf16.msra.mxu0 0
  %1356 = vmatprep.mubr.bf16.mxu0 0
  %1357 = vmatmul.mubr.bf16.gmra.mrb[0].mxu0 %v1322
  %v1358 = vpop.f32.mrb[0].mxu0
  %v1359 = vadd.f32 0.0, %v1358
  %v1360 = vpop.f32.mrb[0].mxu0
  %v1361 = vpop.f32.mrb[0].mxu0
  %v1362 = vpop.f32.mrb[0].mxu0
  %1363 = vdwg.mxu0
  %v1364 = vadd.f32 %v874, %v1359
  %v1365 = vxor.u32 %v1364, 2147483648
  %v1366 = vmul.f32 %v1365, 1.442695
  %v1367 = vpow.pop %v1366
  %v1368 = vadd.f32 %v1367, 1.0
  %v1369 = vrcp.pop %v1368
  %v1370 = vmul.f32 1.0, %v1369
  %v1371 = vtanh.pop %v1364
  %v1372 = vmul.f32 %v1370, %v1310
  %1374 = vrot.lane.b32.xlu0 %v1371, 64
  %v1375 = vpop.permute.xlu0 %1374
  %v1377 = vmul.f32 %v1370, %v1375
  %1379 = vrot.lane.b32.xlu0 %v1377, 32
  %v1380 = vpop.permute.xlu0 %1379
  %v1382 = vadd.f32 %v1372, %v1380
  %v1383 = vtanh.pop %v1382
  %1385 = vrot.lane.b32.xlu0 %v1383, 64
  %v1386 = vpop.permute.xlu0 %1385
  %v1388 = vmul.f32 %v1370, %v1386
  %v1389 = vpack.c.bf16 %v1388, %v1388
  %1391 = vrot.lane.b32.xlu0 %v1389, 32
  %v1392 = vpop.permute.xlu0 %1391
  %v1394 = vsel %vm151, %v1392, 0
  %1396 = vmatprep.subr.bf16.mxu0 0
  %1397 = vmatpush1.bf16.msra.mxu0 %v888
  %1398 = vmatprep.subr.bf16.mxu0 0
  %1399 = vmatpush1.bf16.msra.mxu0 %v889
  %1400 = vmatprep.subr.bf16.mxu0 0
  %1401 = vmatpush1.bf16.msra.mxu0 0
  %1402 = vmatprep.subr.bf16.mxu0 0
  %1403 = vmatpush1.bf16.msra.mxu0 0
  %1404 = vmatprep.subr.bf16.mxu0 0
  %1405 = vmatpush1.bf16.msra.mxu0 0
  %1406 = vmatprep.subr.bf16.mxu0 0
  %1407 = vmatpush1.bf16.msra.mxu0 0
  %1408 = vmatprep.subr.bf16.mxu0 0
  %1409 = vmatpush1.bf16.msra.mxu0 0
  %1410 = vmatprep.subr.bf16.mxu0 0
  %1411 = vmatpush1.bf16.msra.mxu0 0
  %1412 = vmatprep.subr.bf16.mxu0 0
  %1413 = vmatpush1.bf16.msra.mxu0 0
  %1414 = vmatprep.subr.bf16.mxu0 0
  %1415 = vmatpush1.bf16.msra.mxu0 0
  %1416 = vmatprep.subr.bf16.mxu0 0
  %1417 = vmatpush1.bf16.msra.mxu0 0
  %1418 = vmatprep.subr.bf16.mxu0 0
  %1419 = vmatpush1.bf16.msra.mxu0 0
  %1420 = vmatprep.subr.bf16.mxu0 0
  %1421 = vmatpush1.bf16.msra.mxu0 0
  %1422 = vmatprep.subr.bf16.mxu0 0
  %1423 = vmatpush1.bf16.msra.mxu0 0
  %1424 = vmatprep.subr.bf16.mxu0 0
  %1425 = vmatpush1.bf16.msra.mxu0 0
  %1426 = vmatprep.subr.bf16.mxu0 0
  %1427 = vmatpush1.bf16.msra.mxu0 0
  %1428 = vmatprep.mubr.bf16.mxu0 0
  %1429 = vmatmul.mubr.bf16.gmra.mrb[0].mxu0 %v1394
  %v1430 = vpop.f32.mrb[0].mxu0
  %v1431 = vadd.f32 0.0, %v1430
  %v1432 = vpop.f32.mrb[0].mxu0
  %v1433 = vpop.f32.mrb[0].mxu0
  %v1434 = vpop.f32.mrb[0].mxu0
  %1435 = vdwg.mxu0
  %v1436 = vadd.f32 %v877, %v1431
  %v1437 = vxor.u32 %v1436, 2147483648
  %v1438 = vmul.f32 %v1437, 1.442695
  %v1439 = vpow.pop %v1438
  %v1440 = vadd.f32 %v1439, 1.0
  %v1441 = vrcp.pop %v1440
  %v1442 = vmul.f32 1.0, %v1441
  %v1443 = vtanh.pop %v1436
  %v1444 = vmul.f32 %v1442, %v1382
  %1446 = vrot.lane.b32.xlu0 %v1443, 64
  %v1447 = vpop.permute.xlu0 %1446
  %v1449 = vmul.f32 %v1442, %v1447
  %1451 = vrot.lane.b32.xlu0 %v1449, 32
  %v1452 = vpop.permute.xlu0 %1451
  %v1454 = vadd.f32 %v1444, %v1452
  %v1455 = vtanh.pop %v1454
  %1457 = vrot.lane.b32.xlu0 %v1455, 64
  %v1458 = vpop.permute.xlu0 %1457
  %v1460 = vmul.f32 %v1442, %v1458
  %v1461 = vpack.c.bf16 %v1460, %v1460
  %v1462 = vld [vmem:[%s7] sm:$0xf]
  %v1463 = vld [vmem:[%s7 + $0x4] sm:$0xf]
  %v1464 = vld [vmem:[%s7 + $0x8] sm:$0xf]
  %v1465 = vld [vmem:[%s7 + $0xc] sm:$0xf]
  %v1466 = vld [vmem:[%s8] sm:$0x1]
  %v1468 = vlaneseq
  %v1469 = vshrl.u32 %v1468, 7
  %v1470 = vsub.s32 0, %v1469
  %v1471 = vrot.slane %v1466, %v1470
  %1474 = vrot.lane.b32.xlu0 %v1461, 32
  %v1475 = vpop.permute.xlu0 %1474
  %v1480 = vunpack.c.l.b16 %v1462
  %v1481 = vunpack.c.l.b16 %v1463
  %v1482 = vunpack.c.l.b16 %v1464
  %v1483 = vunpack.c.l.b16 %v1465
  %v1484 = vpack.c.b16 %v1481, %v1480
  %v1485 = vpack.c.b16 %v1483, %v1482
  %v1489 = vsel %vm151, %v1475, 0
  %1491 = vmatprep.subr.bf16.mxu0 0
  %1492 = vmatpush1.bf16.msra.mxu0 %v1484
  %1493 = vmatprep.subr.bf16.mxu0 0
  %1494 = vmatpush1.bf16.msra.mxu0 %v1485
  %1495 = vmatprep.subr.bf16.mxu0 0
  %1496 = vmatpush1.bf16.msra.mxu0 0
  %1497 = vmatprep.subr.bf16.mxu0 0
  %1498 = vmatpush1.bf16.msra.mxu0 0
  %1499 = vmatprep.subr.bf16.mxu0 0
  %1500 = vmatpush1.bf16.msra.mxu0 0
  %1501 = vmatprep.subr.bf16.mxu0 0
  %1502 = vmatpush1.bf16.msra.mxu0 0
  %1503 = vmatprep.subr.bf16.mxu0 0
  %1504 = vmatpush1.bf16.msra.mxu0 0
  %1505 = vmatprep.subr.bf16.mxu0 0
  %1506 = vmatpush1.bf16.msra.mxu0 0
  %1507 = vmatprep.subr.bf16.mxu0 0
  %1508 = vmatpush1.bf16.msra.mxu0 0
  %1509 = vmatprep.subr.bf16.mxu0 0
  %1510 = vmatpush1.bf16.msra.mxu0 0
  %1511 = vmatprep.subr.bf16.mxu0 0
  %1512 = vmatpush1.bf16.msra.mxu0 0
  %1513 = vmatprep.subr.bf16.mxu0 0
  %1514 = vmatpush1.bf16.msra.mxu0 0
  %1515 = vmatprep.subr.bf16.mxu0 0
  %1516 = vmatpush1.bf16.msra.mxu0 0
  %1517 = vmatprep.subr.bf16.mxu0 0
  %1518 = vmatpush1.bf16.msra.mxu0 0
  %1519 = vmatprep.subr.bf16.mxu0 0
  %1520 = vmatpush1.bf16.msra.mxu0 0
  %1521 = vmatprep.subr.bf16.mxu0 0
  %1522 = vmatpush1.bf16.msra.mxu0 0
  %1523 = vmatprep.mubr.bf16.mxu0 0
  %1524 = vmatmul.mubr.bf16.gmra.mrb[0].mxu0 %v1489
  %v1525 = vpop.f32.mrb[0].mxu0
  %v1526 = vadd.f32 %v1471, %v1525
  %v1527 = vpop.f32.mrb[0].mxu0
  %v1528 = vpop.f32.mrb[0].mxu0
  %v1529 = vpop.f32.mrb[0].mxu0
  %1530 = vdwg.mxu0
  %1531 = vst.msk [vmem:[%s9] sm:$0xff] %vm57, %v1526
  // Predicated region
  $region38: #{tpu_custom_call.1} parent=0 // pred_check
    _
  $region39: #{tpu_custom_call.1} parent=0 // pred_check_branch
    %1533 = sbr.rel (0) target = $region41
  $region40: #{tpu_custom_call.1} parent=0 // pred_region
    _
  $region41: #{tpu_custom_call.1} parent=0 // pred_fallthru
    _
  // Predicated region
  $region42: #{tpu_custom_call.1} parent=0 // pred_check
    _
  $region43: #{tpu_custom_call.1} parent=0 // pred_check_branch
    %1535 = sbr.rel (0) target = $region45
  $region44: #{tpu_custom_call.1} parent=0 // pred_region
    _
  $region45: #{tpu_custom_call.1} parent=0 // pred_fallthru
    _

</llo_original>
